<compile_context>
chip_gen: v5e
topology: v5e:2x2
jax: 0.10.0
libtpu: 0.0.40
codegen_flags: <defaults>
</compile_context>

<pallas_src>
import jax
import jax.numpy as jnp
from jax.experimental import pallas as pl
from jax.experimental.pallas import tpu as pltpu


def _round_up(x, m):
    return (x + m - 1) // m * m


def make_mlp_kernel(n_layers):
    """Build a fused MLP kernel for a fixed number of Linear layers.

    Kernel ref layout (positional):
      refs[0]                     : x tile   (TM, D_in)
      refs[1 + 2*i], refs[2 + 2*i]: W_i (D_i, D_{i+1}), b_i (1, D_{i+1})   [VMEM-resident]
      refs[-1]                    : out tile (TM, C_pad)
    """

    def kernel(*refs):
        x_ref = refs[0]
        out_ref = refs[-1]
        # Cast the activation tile once to the MXU operand dtype (bf16 by default).
        h = x_ref[...].astype(refs[1].dtype)
        for i in range(n_layers):
            w_ref = refs[1 + 2 * i]
            b_ref = refs[2 + 2 * i]
            # MXU matmul in the weight dtype, f32 accumulation.
            acc = jnp.dot(h, w_ref[...], preferred_element_type=jnp.float32)
            # Bias add (+ ReLU) in f32 on the VPU (v5e-safe: no bf16 VALU there).
            acc = acc + b_ref[...].astype(jnp.float32)
            if i < n_layers - 1:
                acc = jnp.maximum(acc, 0.0)
                # Store the inter-layer intermediate in the (narrow) weight dtype:
                # halves vst/vld traffic and vreg pressure on the hidden layers.
                h = acc.astype(refs[1 + 2 * (i + 1)].dtype)
            else:
                out_ref[...] = acc.astype(out_ref.dtype)

    return kernel


def _choose_tile_m(n_rows, tile_m):
    """Pick the batch tile: big by default, >=2 'parallel' steps when there's work."""
    tile_m = _round_up(max(int(tile_m), 8), 8)  # (8,128) sublane rule
    tm = min(tile_m, _round_up(n_rows, 8))
    n_steps = -(-n_rows // tm)
    # Ensure at least 2 grid steps (v7x megacore: 2 TensorCores) when there is enough
    # work; never shrink below 256 rows just to manufacture extra steps.
    if n_steps < 2 and n_rows >= 512:
        tm = max(256, _round_up(-(-n_rows // 2), 8))
    return tm


def mlp_forward(x, params, *, tile_m=512, param_dtype=jnp.bfloat16):
    """Run the fused MLP Pallas kernel.

    Args:
      x: (N, D) input batch (float32).
      params: list of (w, b) with w of shape (in, out) and b of shape (1, out).
      tile_m: batch tile target (rows per grid step, rounded up to a multiple of 8).
              512 is a good default on all generations; the wrapper guarantees >= 2
              grid steps for batches >= 512 rows so v7x's 2 TensorCores stay busy.
      param_dtype: MXU operand dtype for the weights (bf16 default on every
              generation; pass jnp.float32 for a near-exact path).  Biases and the
              accumulate / bias-add / ReLU epilogue stay f32.
    Returns:
      (N, n_classes) logits in x.dtype.
    """
    n_layers = len(params)
    assert n_layers >= 1
    N, D = x.shape
    C = params[-1][0].shape[1]

    # Lane-dense output: pad class dim to a multiple of 128 lanes (unmasked vst).
    C_pad = _round_up(C, 128)

    TM = _choose_tile_m(N, tile_m)
    grid = (pl.cdiv(N, TM),)  # ragged last tile handled by Pallas boundary masking

    # Prepare weights: zero-pad last layer out to C_pad (pad logits are exactly 0 and
    # sliced off), cast weights to the MXU operand dtype; biases stay f32.
    prepared = []
    for li, (w, b) in enumerate(params):
        if li == n_layers - 1 and C_pad != C:
            w = jnp.pad(w, ((0, 0), (0, C_pad - C)))
            b = jnp.pad(b, ((0, 0), (0, C_pad - C)))
        if param_dtype is not None:
            w = w.astype(param_dtype)
        prepared.append((w, b.astype(jnp.float32)))

    kernel = make_mlp_kernel(n_layers)

    # x / out are tiled over the batch grid; weights & biases live whole in VMEM with
    # a single buffer (no per-step DMA, no double-buffering of constant blocks).
    in_specs = [pl.BlockSpec((TM, D), lambda i: (i, 0))]
    args = [x]
    weight_bytes = 0
    flops = 0
    for w, b in prepared:
        in_specs.append(pl.BlockSpec(memory_space=pltpu.MemorySpace.VMEM))
        in_specs.append(pl.BlockSpec(memory_space=pltpu.MemorySpace.VMEM))
        args.append(w)
        args.append(b)
        weight_bytes += w.size * w.dtype.itemsize + b.size * b.dtype.itemsize
        flops += 2 * N * w.shape[0] * w.shape[1]

    out_spec = pl.BlockSpec((TM, C_pad), lambda i: (i, 0))

    bytes_accessed = (
        x.size * x.dtype.itemsize + weight_bytes + N * C_pad * x.dtype.itemsize
    )

    out = pl.pallas_call(
        kernel,
        grid=grid,
        in_specs=in_specs,
        out_specs=out_spec,
        out_shape=jax.ShapeDtypeStruct((N, C_pad), x.dtype),
        cost_estimate=pl.CostEstimate(
            flops=flops, transcendentals=0, bytes_accessed=bytes_accessed
        ),
        # Weight footprint here is < 1 MB (single-buffered), far under every
        # generation's scoped-VMEM default (incl. v7x).  If hidden dims are scaled
        # up, set vmem_limit_bytes explicitly and/or tile the weights over K.
        compiler_params=pltpu.CompilerParams(
            dimension_semantics=("parallel",),
        ),
    )(*args)

    return out[:, :C]


def init_mlp_params(key, input_size, n_classes, dimensions):
    """Deterministic init mimicking nn.Linear defaults (uniform(-1/sqrt(fan_in), +)).

    Returns params as a list of (w, b) with w already transposed to (in, out) and b
    shaped (1, out).
    """
    layer_sizes = [input_size] + list(dimensions) + [n_classes]
    params = []
    for i in range(len(layer_sizes) - 1):
        fan_in = layer_sizes[i]
        fan_out = layer_sizes[i + 1]
        key, kw, kb = jax.random.split(key, 3)
        bound = 1.0 / jnp.sqrt(jnp.float32(fan_in))
        w = jax.random.uniform(
            kw, (fan_in, fan_out), dtype=jnp.float32, minval=-bound, maxval=bound
        )
        b = jax.random.uniform(
            kb, (1, fan_out), dtype=jnp.float32, minval=-bound, maxval=bound
        )
        params.append((w, b))
    return params


def mlp_reference(x, params):
    """Pure-JAX reference of the same forward pass (for correctness checking)."""
    h = x
    for i, (w, b) in enumerate(params):
        h = h @ w + b
        if i < len(params) - 1:
            h = jnp.maximum(h, 0.0)
    return h


# TODO(synk): the module's optional `activations` list of arbitrary callables is not
# supported inside the kernel; only the default torch.relu path is implemented.

if __name__ == "__main__":
    # Shapes consistent with the module: input_size=64, default hidden dimensions
    # [512, 256, 128], n_classes=10.  Batch N=200 exercises the ragged (masked)
    # last batch tile; the tile_m=128 run below also exercises a multi-step grid.
    input_size = 64
    n_classes = 10
    dimensions = [512, 256, 128]
    N = 200

    key = jax.random.PRNGKey(0)
    key, kx = jax.random.split(key)
    x = jax.random.normal(kx, (N, input_size), dtype=jnp.float32)

    params = init_mlp_params(key, input_size, n_classes, dimensions)
    ref = mlp_reference(x, params)

    # f32-weight path: near-exact vs reference.
    logits_f32 = jax.block_until_ready(mlp_forward(x, params, param_dtype=jnp.float32))
    assert logits_f32.shape == (N, n_classes), logits_f32.shape
    assert jnp.allclose(logits_f32, ref, atol=5e-3, rtol=5e-3), (
        float(jnp.max(jnp.abs(logits_f32 - ref)))
    )

    # Default path (bf16 MXU operands, f32 accumulation / epilogue): loose tolerance.
    logits = jax.block_until_ready(mlp_forward(x, params))
    assert logits.shape == (N, n_classes), logits.shape
    assert bool(jnp.all(jnp.isfinite(logits)))
    assert jnp.allclose(logits, ref, atol=1.5e-1, rtol=1e-1), (
        float(jnp.max(jnp.abs(logits - ref)))
    )

    # Multi-step grid (grid=(2,), ragged last tile) to exercise boundary masking.
    logits_mt = jax.block_until_ready(
        mlp_forward(x, params, tile_m=128, param_dtype=jnp.float32)
    )
    assert jnp.allclose(logits_mt, ref, atol=5e-3, rtol=5e-3), (
        float(jnp.max(jnp.abs(logits_mt - ref)))
    )

    print("KERNEL_OK")
</pallas_src>

<mosaic_0001>
module attributes {stable_mosaic.version = 11 : i64} {
  func.func @kernel(%arg0: i32, %arg1: memref<200x64xf32, #tpu.memory_space<vmem>>, %arg2: memref<64x512xf32, #tpu.memory_space<vmem>>, %arg3: memref<1x512xf32, #tpu.memory_space<vmem>>, %arg4: memref<512x256xf32, #tpu.memory_space<vmem>>, %arg5: memref<1x256xf32, #tpu.memory_space<vmem>>, %arg6: memref<256x128xf32, #tpu.memory_space<vmem>>, %arg7: memref<1x128xf32, #tpu.memory_space<vmem>>, %arg8: memref<128x128xf32, #tpu.memory_space<vmem>>, %arg9: memref<1x128xf32, #tpu.memory_space<vmem>>, %arg10: memref<200x128xf32, #tpu.memory_space<vmem>>) attributes {dimension_semantics = [#tpu.dimension_semantics<parallel>], iteration_bounds = array<i64: 1>, scalar_prefetch = 0 : i64, scratch_operands = 0 : i64, tpu.core_type = #tpu.core_type<tc>, window_params = [{transform_indices = @transform_0, window_bounds = array<i64: 200, 64>}, {pipeline_mode = #tpu.pipeline_mode<synchronous>, transform_indices = @transform_1, window_bounds = array<i64: 64, 512>}, {pipeline_mode = #tpu.pipeline_mode<synchronous>, transform_indices = @transform_2, window_bounds = array<i64: 1, 512>}, {pipeline_mode = #tpu.pipeline_mode<synchronous>, transform_indices = @transform_3, window_bounds = array<i64: 512, 256>}, {pipeline_mode = #tpu.pipeline_mode<synchronous>, transform_indices = @transform_4, window_bounds = array<i64: 1, 256>}, {pipeline_mode = #tpu.pipeline_mode<synchronous>, transform_indices = @transform_5, window_bounds = array<i64: 256, 128>}, {pipeline_mode = #tpu.pipeline_mode<synchronous>, transform_indices = @transform_6, window_bounds = array<i64: 1, 128>}, {pipeline_mode = #tpu.pipeline_mode<synchronous>, transform_indices = @transform_7, window_bounds = array<i64: 128, 128>}, {pipeline_mode = #tpu.pipeline_mode<synchronous>, transform_indices = @transform_8, window_bounds = array<i64: 1, 128>}, {transform_indices = @transform_9, window_bounds = array<i64: 200, 128>}]} {
    %c0 = arith.constant 0 : index
    %c0_0 = arith.constant 0 : index
    %0 = vector.load %arg1[%c0, %c0_0] : memref<200x64xf32, #tpu.memory_space<vmem>>, vector<200x64xf32>
    %c0_1 = arith.constant 0 : index
    %c0_2 = arith.constant 0 : index
    %1 = vector.load %arg2[%c0_1, %c0_2] : memref<64x512xf32, #tpu.memory_space<vmem>>, vector<64x512xf32>
    %cst = arith.constant dense<0.000000e+00> : vector<200x512xf32>
    %2 = tpu.matmul %0, %1, %cst {dimension_numbers = #tpu.dot_dimension_numbers<[1], [0], [0], [1], [0, 0, 1, 1], [], []>} : vector<200x64xf32>, vector<64x512xf32>, vector<200x512xf32> -> vector<200x512xf32>
    %c0_3 = arith.constant 0 : index
    %c0_4 = arith.constant 0 : index
    %3 = vector.load %arg3[%c0_3, %c0_4] : memref<1x512xf32, #tpu.memory_space<vmem>>, vector<1x512xf32>
    %4 = vector.broadcast %3 : vector<1x512xf32> to vector<200x512xf32>
    %5 = arith.addf %2, %4 : vector<200x512xf32>
    %cst_5 = arith.constant 0.000000e+00 : f32
    %6 = vector.broadcast %cst_5 : f32 to vector<200x512xf32>
    %7 = arith.maximumf %5, %6 : vector<200x512xf32>
    %c0_6 = arith.constant 0 : index
    %c0_7 = arith.constant 0 : index
    %8 = vector.load %arg4[%c0_6, %c0_7] : memref<512x256xf32, #tpu.memory_space<vmem>>, vector<512x256xf32>
    %cst_8 = arith.constant dense<0.000000e+00> : vector<200x256xf32>
    %9 = tpu.matmul %7, %8, %cst_8 {dimension_numbers = #tpu.dot_dimension_numbers<[1], [0], [0], [1], [0, 0, 1, 1], [], []>} : vector<200x512xf32>, vector<512x256xf32>, vector<200x256xf32> -> vector<200x256xf32>
    %c0_9 = arith.constant 0 : index
    %c0_10 = arith.constant 0 : index
    %10 = vector.load %arg5[%c0_9, %c0_10] : memref<1x256xf32, #tpu.memory_space<vmem>>, vector<1x256xf32>
    %11 = vector.broadcast %10 : vector<1x256xf32> to vector<200x256xf32>
    %12 = arith.addf %9, %11 : vector<200x256xf32>
    %cst_11 = arith.constant 0.000000e+00 : f32
    %13 = vector.broadcast %cst_11 : f32 to vector<200x256xf32>
    %14 = arith.maximumf %12, %13 : vector<200x256xf32>
    %c0_12 = arith.constant 0 : index
    %c0_13 = arith.constant 0 : index
    %15 = vector.load %arg6[%c0_12, %c0_13] : memref<256x128xf32, #tpu.memory_space<vmem>>, vector<256x128xf32>
    %cst_14 = arith.constant dense<0.000000e+00> : vector<200x128xf32>
    %16 = tpu.matmul %14, %15, %cst_14 {dimension_numbers = #tpu.dot_dimension_numbers<[1], [0], [0], [1], [0, 0, 1, 1], [], []>} : vector<200x256xf32>, vector<256x128xf32>, vector<200x128xf32> -> vector<200x128xf32>
    %c0_15 = arith.constant 0 : index
    %c0_16 = arith.constant 0 : index
    %17 = vector.load %arg7[%c0_15, %c0_16] : memref<1x128xf32, #tpu.memory_space<vmem>>, vector<1x128xf32>
    %18 = vector.broadcast %17 : vector<1x128xf32> to vector<200x128xf32>
    %19 = arith.addf %16, %18 : vector<200x128xf32>
    %cst_17 = arith.constant 0.000000e+00 : f32
    %20 = vector.broadcast %cst_17 : f32 to vector<200x128xf32>
    %21 = arith.maximumf %19, %20 : vector<200x128xf32>
    %c0_18 = arith.constant 0 : index
    %c0_19 = arith.constant 0 : index
    %22 = vector.load %arg8[%c0_18, %c0_19] : memref<128x128xf32, #tpu.memory_space<vmem>>, vector<128x128xf32>
    %cst_20 = arith.constant dense<0.000000e+00> : vector<200x128xf32>
    %23 = tpu.matmul %21, %22, %cst_20 {dimension_numbers = #tpu.dot_dimension_numbers<[1], [0], [0], [1], [0, 0, 1, 1], [], []>} : vector<200x128xf32>, vector<128x128xf32>, vector<200x128xf32> -> vector<200x128xf32>
    %c0_21 = arith.constant 0 : index
    %c0_22 = arith.constant 0 : index
    %24 = vector.load %arg9[%c0_21, %c0_22] : memref<1x128xf32, #tpu.memory_space<vmem>>, vector<1x128xf32>
    %25 = vector.broadcast %24 : vector<1x128xf32> to vector<200x128xf32>
    %26 = arith.addf %23, %25 : vector<200x128xf32>
    %c0_23 = arith.constant 0 : index
    %c0_24 = arith.constant 0 : index
    %27 = vector.load %arg10[%c0_23, %c0_24] : memref<200x128xf32, #tpu.memory_space<vmem>>, vector<200x128xf32>
    tpu.vector_store %arg10[%c0_23, %c0_24], %26 {strides = array<i32>} : memref<200x128xf32, #tpu.memory_space<vmem>>, vector<200x128xf32>,
    return
  }
  func.func @transform_0(%arg0: i32) -> (i32, i32) {
    %c0_i32 = arith.constant 0 : i32
    %c0_i32_0 = arith.constant 0 : i32
    return %arg0, %c0_i32 : i32, i32
  }
  func.func @transform_1(%arg0: i32) -> (i32, i32) {
    %c0_i32 = arith.constant 0 : i32
    %c0_i32_0 = arith.constant 0 : i32
    %c0_i32_1 = arith.constant 0 : i32
    return %c0_i32, %c0_i32_0 : i32, i32
  }
  func.func @transform_2(%arg0: i32) -> (i32, i32) {
    %c0_i32 = arith.constant 0 : i32
    %c0_i32_0 = arith.constant 0 : i32
    %c0_i32_1 = arith.constant 0 : i32
    return %c0_i32, %c0_i32_0 : i32, i32
  }
  func.func @transform_3(%arg0: i32) -> (i32, i32) {
    %c0_i32 = arith.constant 0 : i32
    %c0_i32_0 = arith.constant 0 : i32
    %c0_i32_1 = arith.constant 0 : i32
    return %c0_i32, %c0_i32_0 : i32, i32
  }
  func.func @transform_4(%arg0: i32) -> (i32, i32) {
    %c0_i32 = arith.constant 0 : i32
    %c0_i32_0 = arith.constant 0 : i32
    %c0_i32_1 = arith.constant 0 : i32
    return %c0_i32, %c0_i32_0 : i32, i32
  }
  func.func @transform_5(%arg0: i32) -> (i32, i32) {
    %c0_i32 = arith.constant 0 : i32
    %c0_i32_0 = arith.constant 0 : i32
    %c0_i32_1 = arith.constant 0 : i32
    return %c0_i32, %c0_i32_0 : i32, i32
  }
  func.func @transform_6(%arg0: i32) -> (i32, i32) {
    %c0_i32 = arith.constant 0 : i32
    %c0_i32_0 = arith.constant 0 : i32
    %c0_i32_1 = arith.constant 0 : i32
    return %c0_i32, %c0_i32_0 : i32, i32
  }
  func.func @transform_7(%arg0: i32) -> (i32, i32) {
    %c0_i32 = arith.constant 0 : i32
    %c0_i32_0 = arith.constant 0 : i32
    %c0_i32_1 = arith.constant 0 : i32
    return %c0_i32, %c0_i32_0 : i32, i32
  }
  func.func @transform_8(%arg0: i32) -> (i32, i32) {
    %c0_i32 = arith.constant 0 : i32
    %c0_i32_0 = arith.constant 0 : i32
    %c0_i32_1 = arith.constant 0 : i32
    return %c0_i32, %c0_i32_0 : i32, i32
  }
  func.func @transform_9(%arg0: i32) -> (i32, i32) {
    %c0_i32 = arith.constant 0 : i32
    %c0_i32_0 = arith.constant 0 : i32
    return %arg0, %c0_i32 : i32, i32
  }
}

</mosaic_0001>

<llo_original>
// kernel: tpu_custom_call.1
$region0: #{tpu_custom_call.1}
  #allocation0 [shape = 'u32[]', space=smem, size = 0x4, offset = 0x4, fixed_abs, tag = 'smem constant byte address 0x4 - core index']
  #allocation1 [shape = 'u32[72,128]{1,0:T(1,128)}', space=vmem, size = 0x9000, scoped, tag = 'internal scratch']
  %s0 = inlined_call_operand.vmem [shape: f32[200,64], index: 0, kind: input, shape index: {}]
  %s1 = inlined_call_operand.vmem [shape: f32[64,512], index: 1, kind: input, shape index: {}]
  %s2 = inlined_call_operand.vmem [shape: f32[1,512], index: 2, kind: input, shape index: {}]
  %s3 = inlined_call_operand.hbm [shape: f32[512,256], index: 3, kind: input, shape index: {}]
  %s4 = inlined_call_operand.vmem [shape: f32[1,256], index: 4, kind: input, shape index: {}]
  %s5 = inlined_call_operand.hbm [shape: f32[256,128], index: 5, kind: input, shape index: {}]
  %s6 = inlined_call_operand.vmem [shape: f32[1,128], index: 6, kind: input, shape index: {}]
  %s7 = inlined_call_operand.hbm [shape: f32[128,128], index: 7, kind: input, shape index: {}]
  %s8 = inlined_call_operand.vmem [shape: f32[1,128], index: 8, kind: input, shape index: {}]
  %s9 = inlined_call_operand.hbm [shape: f32[200,128], index: 9, kind: output, shape index: {}]
  %s10 = sld [smem:[#allocation0]]
  $region58: #{tpu_custom_call.1} parent=0
    _
  %s12 = ssub.s32 1, %s10
  %s13 = scalar_select 0, %s12, %s10
  $region1: #{tpu_custom_call.1} parent=0
    #allocation2 [shape = 'u8[524288]{0}', space=vmem, size = 0x80000, scoped, tag = 'input window, operand 3, single buffered']
    #allocation3 [shape = 's32[1]{0}', space=sflag, size = 0x4, scoped, tag = 'scoped memory for tpu_custom_call.1']
    #allocation4 [shape = 's32[1]{0}', space=sflag, size = 0x4, scoped, tag = 'scoped memory for tpu_custom_call.1']
    #allocation5 [shape = 'u8[131072]{0}', space=vmem, size = 0x20000, scoped, tag = 'input window, operand 5, single buffered']
    #allocation6 [shape = 's32[1]{0}', space=sflag, size = 0x4, scoped, tag = 'scoped memory for tpu_custom_call.1']
    #allocation7 [shape = 'u8[65536]{0}', space=vmem, size = 0x10000, scoped, tag = 'input window, operand 7, single buffered']
    #allocation8 [shape = 'u8[102400]{0}', space=vmem, size = 0x19000, scoped, tag = 'output window, operand 0, single buffered']
    %14 = vsyncpa [#allocation3], 0
    %15 = vsyncpa [#allocation6], 0
    %16 = vsyncpa [#allocation4], 0
    // Predicated region
    $region2: #{tpu_custom_call.1} parent=1 // pred_check
      _
    $region3: #{tpu_custom_call.1} parent=1 // pred_check_branch
      %18 = sbr.rel (0) target = $region5
    $region4: #{tpu_custom_call.1} parent=1 // pred_region
      _
    $region5: #{tpu_custom_call.1} parent=1 // pred_fallthru
      _
    // Predicated region
    $region6: #{tpu_custom_call.1} parent=1 // pred_check
      _
    $region7: #{tpu_custom_call.1} parent=1 // pred_check_branch
      %20 = sbr.rel (0) target = $region9
    $region8: #{tpu_custom_call.1} parent=1 // pred_region
      _
    $region9: #{tpu_custom_call.1} parent=1 // pred_fallthru
      _
    // Predicated region
    $region10: #{tpu_custom_call.1} parent=1 // pred_check
      _
    $region11: #{tpu_custom_call.1} parent=1 // pred_check_branch
      %22 = sbr.rel (0) target = $region13
    $region12: #{tpu_custom_call.1} parent=1 // pred_region
      _
    $region13: #{tpu_custom_call.1} parent=1 // pred_fallthru
      _
    // Predicated region
    $region14: #{tpu_custom_call.1} parent=1 // pred_check
      _
    $region15: #{tpu_custom_call.1} parent=1 // pred_check_branch
      %24 = sbr.rel (0) target = $region17
    $region16: #{tpu_custom_call.1} parent=1 // pred_region
      %26 = vsyncadd [#allocation3], 0
      %s27 = sshll.u32 %s3, 4
      %s28 = int_to_ptr.hbm [resolvable:$true] %s27
      %s29 = sshll.u32 [#allocation2], 4
      %s30 = int_to_ptr.vmem [resolvable:$true] %s29
      %35 = dma.hbm_to_vmem [thread:$0]  %s28, 16384, %s30, [#allocation3], 256, 256, 16
    $region17: #{tpu_custom_call.1} parent=1 // pred_fallthru
      _
    // Predicated region
    $region18: #{tpu_custom_call.1} parent=1 // pred_check
      _
    $region19: #{tpu_custom_call.1} parent=1 // pred_check_branch
      %37 = sbr.rel (0) target = $region21
    $region20: #{tpu_custom_call.1} parent=1 // pred_region
      _
    $region21: #{tpu_custom_call.1} parent=1 // pred_fallthru
      _
    // Predicated region
    $region22: #{tpu_custom_call.1} parent=1 // pred_check
      _
    $region23: #{tpu_custom_call.1} parent=1 // pred_check_branch
      %39 = sbr.rel (0) target = $region25
    $region24: #{tpu_custom_call.1} parent=1 // pred_region
      %41 = vsyncadd [#allocation6], 0
      %s42 = sshll.u32 %s5, 4
      %s43 = int_to_ptr.hbm [resolvable:$true] %s42
      %s44 = sshll.u32 [#allocation5], 4
      %s45 = int_to_ptr.vmem [resolvable:$true] %s44
      %50 = dma.hbm_to_vmem [thread:$0]  %s43, 4096, %s45, [#allocation6], 128, 128, 8
    $region25: #{tpu_custom_call.1} parent=1 // pred_fallthru
      _
    // Predicated region
    $region26: #{tpu_custom_call.1} parent=1 // pred_check
      _
    $region27: #{tpu_custom_call.1} parent=1 // pred_check_branch
      %52 = sbr.rel (0) target = $region29
    $region28: #{tpu_custom_call.1} parent=1 // pred_region
      _
    $region29: #{tpu_custom_call.1} parent=1 // pred_fallthru
      _
    // Predicated region
    $region30: #{tpu_custom_call.1} parent=1 // pred_check
      _
    $region31: #{tpu_custom_call.1} parent=1 // pred_check_branch
      %54 = sbr.rel (0) target = $region33
    $region32: #{tpu_custom_call.1} parent=1 // pred_region
      %56 = vsyncadd [#allocation6], 0
      %s57 = sshll.u32 %s7, 4
      %s58 = int_to_ptr.hbm [resolvable:$true] %s57
      %s59 = sshll.u32 [#allocation7], 4
      %s60 = int_to_ptr.vmem [resolvable:$true] %s59
      %65 = dma.hbm_to_vmem [thread:$0]  %s58, 2048, %s60, [#allocation6], 128, 128, 8
    $region33: #{tpu_custom_call.1} parent=1 // pred_fallthru
      _
    // Predicated region
    $region34: #{tpu_custom_call.1} parent=1 // pred_check
      _
    $region35: #{tpu_custom_call.1} parent=1 // pred_check_branch
      %67 = sbr.rel (0) target = $region37
    $region36: #{tpu_custom_call.1} parent=1 // pred_region
      _
    $region37: #{tpu_custom_call.1} parent=1 // pred_fallthru
      _
    // Predicated region
    $region38: #{tpu_custom_call.1} parent=1 // pred_check
      _
    $region39: #{tpu_custom_call.1} parent=1 // pred_check_branch
      %69 = sbr.rel (0) target = $region41
    $region40: #{tpu_custom_call.1} parent=1 // pred_region
      %71 = dma.done [#allocation3], 16384
    $region41: #{tpu_custom_call.1} parent=1 // pred_fallthru
      _
    // Predicated region
    $region42: #{tpu_custom_call.1} parent=1 // pred_check
      _
    $region43: #{tpu_custom_call.1} parent=1 // pred_check_branch
      %73 = sbr.rel (0) target = $region45
    $region44: #{tpu_custom_call.1} parent=1 // pred_region
      %75 = dma.done [#allocation6], 4096
    $region45: #{tpu_custom_call.1} parent=1 // pred_fallthru
      _
    // Predicated region
    $region46: #{tpu_custom_call.1} parent=1 // pred_check
      _
    $region47: #{tpu_custom_call.1} parent=1 // pred_check_branch
      %77 = sbr.rel (0) target = $region49
    $region48: #{tpu_custom_call.1} parent=1 // pred_region
      %79 = dma.done [#allocation6], 2048
    $region49: #{tpu_custom_call.1} parent=1 // pred_fallthru
      _
    %v80 = vld [vmem:[%s0] sm:$0xff]
    %v81 = vld [vmem:[%s0 + $0x8] sm:$0xff]
    %v82 = vld [vmem:[%s0 + $0x10] sm:$0xff]
    %v83 = vld [vmem:[%s0 + $0x18] sm:$0xff]
    %v84 = vld [vmem:[%s0 + $0x20] sm:$0xff]
    %v85 = vld [vmem:[%s0 + $0x28] sm:$0xff]
    %v86 = vld [vmem:[%s0 + $0x30] sm:$0xff]
    %v87 = vld [vmem:[%s0 + $0x38] sm:$0xff]
    %v88 = vld [vmem:[%s0 + $0x40] sm:$0xff]
    %v89 = vld [vmem:[%s0 + $0x48] sm:$0xff]
    %v90 = vld [vmem:[%s0 + $0x50] sm:$0xff]
    %v91 = vld [vmem:[%s0 + $0x58] sm:$0xff]
    %v92 = vld [vmem:[%s0 + $0x60] sm:$0xff]
    %v93 = vld [vmem:[%s0 + $0x68] sm:$0xff]
    %v94 = vld [vmem:[%s0 + $0x70] sm:$0xff]
    %v95 = vld [vmem:[%s0 + $0x78] sm:$0xff]
    %v96 = vld [vmem:[%s0 + $0x80] sm:$0xff]
    %v97 = vld [vmem:[%s0 + $0x88] sm:$0xff]
    %v98 = vld [vmem:[%s0 + $0x90] sm:$0xff]
    %v99 = vld [vmem:[%s0 + $0x98] sm:$0xff]
    %v100 = vld [vmem:[%s0 + $0xa0] sm:$0xff]
    %v101 = vld [vmem:[%s0 + $0xa8] sm:$0xff]
    %v102 = vld [vmem:[%s0 + $0xb0] sm:$0xff]
    %v103 = vld [vmem:[%s0 + $0xb8] sm:$0xff]
    %v104 = vld [vmem:[%s0 + $0xc0] sm:$0xff]
    %v105 = vld [vmem:[%s1] sm:$0xff]
    %v106 = vld [vmem:[%s1 + $0x8] sm:$0xff]
    %v107 = vld [vmem:[%s1 + $0x10] sm:$0xff]
    %v108 = vld [vmem:[%s1 + $0x18] sm:$0xff]
    %v109 = vld [vmem:[%s1 + $0x20] sm:$0xff]
    %v110 = vld [vmem:[%s1 + $0x28] sm:$0xff]
    %v111 = vld [vmem:[%s1 + $0x30] sm:$0xff]
    %v112 = vld [vmem:[%s1 + $0x38] sm:$0xff]
    %v113 = vld [vmem:[%s1 + $0x40] sm:$0xff]
    %v114 = vld [vmem:[%s1 + $0x48] sm:$0xff]
    %v115 = vld [vmem:[%s1 + $0x50] sm:$0xff]
    %v116 = vld [vmem:[%s1 + $0x58] sm:$0xff]
    %v117 = vld [vmem:[%s1 + $0x60] sm:$0xff]
    %v118 = vld [vmem:[%s1 + $0x68] sm:$0xff]
    %v119 = vld [vmem:[%s1 + $0x70] sm:$0xff]
    %v120 = vld [vmem:[%s1 + $0x78] sm:$0xff]
    %v121 = vld [vmem:[%s1 + $0x80] sm:$0xff]
    %v122 = vld [vmem:[%s1 + $0x88] sm:$0xff]
    %v123 = vld [vmem:[%s1 + $0x90] sm:$0xff]
    %v124 = vld [vmem:[%s1 + $0x98] sm:$0xff]
    %v125 = vld [vmem:[%s1 + $0xa0] sm:$0xff]
    %v126 = vld [vmem:[%s1 + $0xa8] sm:$0xff]
    %v127 = vld [vmem:[%s1 + $0xb0] sm:$0xff]
    %v128 = vld [vmem:[%s1 + $0xb8] sm:$0xff]
    %v129 = vld [vmem:[%s1 + $0xc0] sm:$0xff]
    %v130 = vld [vmem:[%s1 + $0xc8] sm:$0xff]
    %v131 = vld [vmem:[%s1 + $0xd0] sm:$0xff]
    %v132 = vld [vmem:[%s1 + $0xd8] sm:$0xff]
    %v133 = vld [vmem:[%s1 + $0xe0] sm:$0xff]
    %v134 = vld [vmem:[%s1 + $0xe8] sm:$0xff]
    %v135 = vld [vmem:[%s1 + $0xf0] sm:$0xff]
    %v136 = vld [vmem:[%s1 + $0xf8] sm:$0xff]
    %v137 = vld [vmem:[%s2] sm:$0xf]
    %v139 = vperm.slane %v137, 0
    %v140 = vperm.slane %v137, 1
    %v141 = vperm.slane %v137, 2
    %v142 = vperm.slane %v137, 3
    %vm147 = vcmask 523264
    %v149 = vsel %vm147, %v80, 0
    %v152 = vsel %vm147, %v81, 0
    %v155 = vsel %vm147, %v82, 0
    %v158 = vsel %vm147, %v83, 0
    %v161 = vsel %vm147, %v84, 0
    %v164 = vsel %vm147, %v85, 0
    %v167 = vsel %vm147, %v86, 0
    %v170 = vsel %vm147, %v87, 0
    %v173 = vsel %vm147, %v88, 0
    %v176 = vsel %vm147, %v89, 0
    %v179 = vsel %vm147, %v90, 0
    %v182 = vsel %vm147, %v91, 0
    %v185 = vsel %vm147, %v92, 0
    %v188 = vsel %vm147, %v93, 0
    %v191 = vsel %vm147, %v94, 0
    %v194 = vsel %vm147, %v95, 0
    %v197 = vsel %vm147, %v96, 0
    %v200 = vsel %vm147, %v97, 0
    %v203 = vsel %vm147, %v98, 0
    %v206 = vsel %vm147, %v99, 0
    %v209 = vsel %vm147, %v100, 0
    %v212 = vsel %vm147, %v101, 0
    %v215 = vsel %vm147, %v102, 0
    %v218 = vsel %vm147, %v103, 0
    %v221 = vsel %vm147, %v104, 0
    %223 = vmatpush.msra.mxu0 0.0
    %224 = vmatpush.msra.mxu0 0.0
    %225 = vmatpush.msra.mxu0 0.0
    %226 = vmatpush.msra.mxu0 0.0
    %227 = vmatpush.msra.mxu0 0.0
    %228 = vmatpush.msra.mxu0 0.0
    %229 = vmatpush.msra.mxu0 0.0
    %230 = vmatpush.msra.mxu0 0.0
    %231 = vmatpush.msra.mxu0 %v133
    %232 = vmatpush.msra.mxu0 %v129
    %233 = vmatpush.msra.mxu0 %v125
    %234 = vmatpush.msra.mxu0 %v121
    %235 = vmatpush.msra.mxu0 %v117
    %236 = vmatpush.msra.mxu0 %v113
    %237 = vmatpush.msra.mxu0 %v109
    %238 = vmatpush.msra.mxu0 %v105
    %239 = vmatmul.f32.gmra.mxu0 %v149
    %v240 = vpop.f32.mrf.mxu0
    %v241 = vadd.f32 %v139, %v240
    %242 = vmatmul.f32.gmra.mxu0 %v152
    %v243 = vpop.f32.mrf.mxu0
    %v244 = vadd.f32 %v139, %v243
    %245 = vmatmul.f32.gmra.mxu0 %v155
    %v246 = vpop.f32.mrf.mxu0
    %v247 = vadd.f32 %v139, %v246
    %248 = vmatmul.f32.gmra.mxu0 %v158
    %v249 = vpop.f32.mrf.mxu0
    %v250 = vadd.f32 %v139, %v249
    %251 = vmatmul.f32.gmra.mxu0 %v161
    %v252 = vpop.f32.mrf.mxu0
    %v253 = vadd.f32 %v139, %v252
    %254 = vmatmul.f32.gmra.mxu0 %v164
    %v255 = vpop.f32.mrf.mxu0
    %v256 = vadd.f32 %v139, %v255
    %257 = vmatmul.f32.gmra.mxu0 %v167
    %v258 = vpop.f32.mrf.mxu0
    %v259 = vadd.f32 %v139, %v258
    %260 = vmatmul.f32.gmra.mxu0 %v170
    %v261 = vpop.f32.mrf.mxu0
    %v262 = vadd.f32 %v139, %v261
    %263 = vmatmul.f32.gmra.mxu0 %v173
    %v264 = vpop.f32.mrf.mxu0
    %v265 = vadd.f32 %v139, %v264
    %266 = vmatmul.f32.gmra.mxu0 %v176
    %v267 = vpop.f32.mrf.mxu0
    %v268 = vadd.f32 %v139, %v267
    %269 = vmatmul.f32.gmra.mxu0 %v179
    %v270 = vpop.f32.mrf.mxu0
    %v271 = vadd.f32 %v139, %v270
    %272 = vmatmul.f32.gmra.mxu0 %v182
    %v273 = vpop.f32.mrf.mxu0
    %v274 = vadd.f32 %v139, %v273
    %275 = vmatmul.f32.gmra.mxu0 %v185
    %v276 = vpop.f32.mrf.mxu0
    %v277 = vadd.f32 %v139, %v276
    %278 = vmatmul.f32.gmra.mxu0 %v188
    %v279 = vpop.f32.mrf.mxu0
    %v280 = vadd.f32 %v139, %v279
    %281 = vmatmul.f32.gmra.mxu0 %v191
    %v282 = vpop.f32.mrf.mxu0
    %v283 = vadd.f32 %v139, %v282
    %284 = vmatmul.f32.gmra.mxu0 %v194
    %v285 = vpop.f32.mrf.mxu0
    %v286 = vadd.f32 %v139, %v285
    %287 = vmatmul.f32.gmra.mxu0 %v197
    %v288 = vpop.f32.mrf.mxu0
    %v289 = vadd.f32 %v139, %v288
    %290 = vmatmul.f32.gmra.mxu0 %v200
    %v291 = vpop.f32.mrf.mxu0
    %v292 = vadd.f32 %v139, %v291
    %293 = vmatmul.f32.gmra.mxu0 %v203
    %v294 = vpop.f32.mrf.mxu0
    %v295 = vadd.f32 %v139, %v294
    %296 = vmatmul.f32.gmra.mxu0 %v206
    %v297 = vpop.f32.mrf.mxu0
    %v298 = vadd.f32 %v139, %v297
    %299 = vmatmul.f32.gmra.mxu0 %v209
    %v300 = vpop.f32.mrf.mxu0
    %v301 = vadd.f32 %v139, %v300
    %302 = vmatmul.f32.gmra.mxu0 %v212
    %v303 = vpop.f32.mrf.mxu0
    %v304 = vadd.f32 %v139, %v303
    %305 = vmatmul.f32.gmra.mxu0 %v215
    %v306 = vpop.f32.mrf.mxu0
    %v307 = vadd.f32 %v139, %v306
    %308 = vmatmul.f32.gmra.mxu0 %v218
    %v309 = vpop.f32.mrf.mxu0
    %v310 = vadd.f32 %v139, %v309
    %311 = vmatmul.f32.gmra.mxu0 %v221
    %v312 = vpop.f32.mrf.mxu0
    %v313 = vadd.f32 %v139, %v312
    %314 = vdwg.mxu0
    %315 = vmatpush.msra.mxu0 0.0
    %316 = vmatpush.msra.mxu0 0.0
    %317 = vmatpush.msra.mxu0 0.0
    %318 = vmatpush.msra.mxu0 0.0
    %319 = vmatpush.msra.mxu0 0.0
    %320 = vmatpush.msra.mxu0 0.0
    %321 = vmatpush.msra.mxu0 0.0
    %322 = vmatpush.msra.mxu0 0.0
    %323 = vmatpush.msra.mxu0 %v134
    %324 = vmatpush.msra.mxu0 %v130
    %325 = vmatpush.msra.mxu0 %v126
    %326 = vmatpush.msra.mxu0 %v122
    %327 = vmatpush.msra.mxu0 %v118
    %328 = vmatpush.msra.mxu0 %v114
    %329 = vmatpush.msra.mxu0 %v110
    %330 = vmatpush.msra.mxu0 %v106
    %331 = vmatmul.f32.gmra.mxu0 %v149
    %v332 = vpop.f32.mrf.mxu0
    %v333 = vadd.f32 %v140, %v332
    %334 = vmatmul.f32.gmra.mxu0 %v152
    %v335 = vpop.f32.mrf.mxu0
    %v336 = vadd.f32 %v140, %v335
    %337 = vmatmul.f32.gmra.mxu0 %v155
    %v338 = vpop.f32.mrf.mxu0
    %v339 = vadd.f32 %v140, %v338
    %340 = vmatmul.f32.gmra.mxu0 %v158
    %v341 = vpop.f32.mrf.mxu0
    %v342 = vadd.f32 %v140, %v341
    %343 = vmatmul.f32.gmra.mxu0 %v161
    %v344 = vpop.f32.mrf.mxu0
    %v345 = vadd.f32 %v140, %v344
    %346 = vmatmul.f32.gmra.mxu0 %v164
    %v347 = vpop.f32.mrf.mxu0
    %v348 = vadd.f32 %v140, %v347
    %349 = vmatmul.f32.gmra.mxu0 %v167
    %v350 = vpop.f32.mrf.mxu0
    %v351 = vadd.f32 %v140, %v350
    %352 = vmatmul.f32.gmra.mxu0 %v170
    %v353 = vpop.f32.mrf.mxu0
    %v354 = vadd.f32 %v140, %v353
    %355 = vmatmul.f32.gmra.mxu0 %v173
    %v356 = vpop.f32.mrf.mxu0
    %v357 = vadd.f32 %v140, %v356
    %358 = vmatmul.f32.gmra.mxu0 %v176
    %v359 = vpop.f32.mrf.mxu0
    %v360 = vadd.f32 %v140, %v359
    %361 = vmatmul.f32.gmra.mxu0 %v179
    %v362 = vpop.f32.mrf.mxu0
    %v363 = vadd.f32 %v140, %v362
    %364 = vmatmul.f32.gmra.mxu0 %v182
    %v365 = vpop.f32.mrf.mxu0
    %v366 = vadd.f32 %v140, %v365
    %367 = vmatmul.f32.gmra.mxu0 %v185
    %v368 = vpop.f32.mrf.mxu0
    %v369 = vadd.f32 %v140, %v368
    %370 = vmatmul.f32.gmra.mxu0 %v188
    %v371 = vpop.f32.mrf.mxu0
    %v372 = vadd.f32 %v140, %v371
    %373 = vmatmul.f32.gmra.mxu0 %v191
    %v374 = vpop.f32.mrf.mxu0
    %v375 = vadd.f32 %v140, %v374
    %376 = vmatmul.f32.gmra.mxu0 %v194
    %v377 = vpop.f32.mrf.mxu0
    %v378 = vadd.f32 %v140, %v377
    %379 = vmatmul.f32.gmra.mxu0 %v197
    %v380 = vpop.f32.mrf.mxu0
    %v381 = vadd.f32 %v140, %v380
    %382 = vmatmul.f32.gmra.mxu0 %v200
    %v383 = vpop.f32.mrf.mxu0
    %v384 = vadd.f32 %v140, %v383
    %385 = vmatmul.f32.gmra.mxu0 %v203
    %v386 = vpop.f32.mrf.mxu0
    %v387 = vadd.f32 %v140, %v386
    %388 = vmatmul.f32.gmra.mxu0 %v206
    %v389 = vpop.f32.mrf.mxu0
    %v390 = vadd.f32 %v140, %v389
    %391 = vmatmul.f32.gmra.mxu0 %v209
    %v392 = vpop.f32.mrf.mxu0
    %v393 = vadd.f32 %v140, %v392
    %394 = vmatmul.f32.gmra.mxu0 %v212
    %v395 = vpop.f32.mrf.mxu0
    %v396 = vadd.f32 %v140, %v395
    %397 = vmatmul.f32.gmra.mxu0 %v215
    %v398 = vpop.f32.mrf.mxu0
    %v399 = vadd.f32 %v140, %v398
    %400 = vmatmul.f32.gmra.mxu0 %v218
    %v401 = vpop.f32.mrf.mxu0
    %v402 = vadd.f32 %v140, %v401
    %403 = vmatmul.f32.gmra.mxu0 %v221
    %v404 = vpop.f32.mrf.mxu0
    %v405 = vadd.f32 %v140, %v404
    %406 = vdwg.mxu0
    %407 = vmatpush.msra.mxu0 0.0
    %408 = vmatpush.msra.mxu0 0.0
    %409 = vmatpush.msra.mxu0 0.0
    %410 = vmatpush.msra.mxu0 0.0
    %411 = vmatpush.msra.mxu0 0.0
    %412 = vmatpush.msra.mxu0 0.0
    %413 = vmatpush.msra.mxu0 0.0
    %414 = vmatpush.msra.mxu0 0.0
    %415 = vmatpush.msra.mxu0 %v135
    %416 = vmatpush.msra.mxu0 %v131
    %417 = vmatpush.msra.mxu0 %v127
    %418 = vmatpush.msra.mxu0 %v123
    %419 = vmatpush.msra.mxu0 %v119
    %420 = vmatpush.msra.mxu0 %v115
    %421 = vmatpush.msra.mxu0 %v111
    %422 = vmatpush.msra.mxu0 %v107
    %423 = vmatmul.f32.gmra.mxu0 %v149
    %v424 = vpop.f32.mrf.mxu0
    %v425 = vadd.f32 %v141, %v424
    %426 = vmatmul.f32.gmra.mxu0 %v152
    %v427 = vpop.f32.mrf.mxu0
    %v428 = vadd.f32 %v141, %v427
    %429 = vmatmul.f32.gmra.mxu0 %v155
    %v430 = vpop.f32.mrf.mxu0
    %v431 = vadd.f32 %v141, %v430
    %432 = vmatmul.f32.gmra.mxu0 %v158
    %v433 = vpop.f32.mrf.mxu0
    %v434 = vadd.f32 %v141, %v433
    %435 = vmatmul.f32.gmra.mxu0 %v161
    %v436 = vpop.f32.mrf.mxu0
    %v437 = vadd.f32 %v141, %v436
    %438 = vmatmul.f32.gmra.mxu0 %v164
    %v439 = vpop.f32.mrf.mxu0
    %v440 = vadd.f32 %v141, %v439
    %441 = vmatmul.f32.gmra.mxu0 %v167
    %v442 = vpop.f32.mrf.mxu0
    %v443 = vadd.f32 %v141, %v442
    %444 = vmatmul.f32.gmra.mxu0 %v170
    %v445 = vpop.f32.mrf.mxu0
    %v446 = vadd.f32 %v141, %v445
    %447 = vmatmul.f32.gmra.mxu0 %v173
    %v448 = vpop.f32.mrf.mxu0
    %v449 = vadd.f32 %v141, %v448
    %450 = vmatmul.f32.gmra.mxu0 %v176
    %v451 = vpop.f32.mrf.mxu0
    %v452 = vadd.f32 %v141, %v451
    %453 = vmatmul.f32.gmra.mxu0 %v179
    %v454 = vpop.f32.mrf.mxu0
    %v455 = vadd.f32 %v141, %v454
    %456 = vmatmul.f32.gmra.mxu0 %v182
    %v457 = vpop.f32.mrf.mxu0
    %v458 = vadd.f32 %v141, %v457
    %459 = vmatmul.f32.gmra.mxu0 %v185
    %v460 = vpop.f32.mrf.mxu0
    %v461 = vadd.f32 %v141, %v460
    %462 = vmatmul.f32.gmra.mxu0 %v188
    %v463 = vpop.f32.mrf.mxu0
    %v464 = vadd.f32 %v141, %v463
    %465 = vmatmul.f32.gmra.mxu0 %v191
    %v466 = vpop.f32.mrf.mxu0
    %v467 = vadd.f32 %v141, %v466
    %468 = vmatmul.f32.gmra.mxu0 %v194
    %v469 = vpop.f32.mrf.mxu0
    %v470 = vadd.f32 %v141, %v469
    %471 = vmatmul.f32.gmra.mxu0 %v197
    %v472 = vpop.f32.mrf.mxu0
    %v473 = vadd.f32 %v141, %v472
    %474 = vmatmul.f32.gmra.mxu0 %v200
    %v475 = vpop.f32.mrf.mxu0
    %v476 = vadd.f32 %v141, %v475
    %477 = vmatmul.f32.gmra.mxu0 %v203
    %v478 = vpop.f32.mrf.mxu0
    %v479 = vadd.f32 %v141, %v478
    %480 = vmatmul.f32.gmra.mxu0 %v206
    %v481 = vpop.f32.mrf.mxu0
    %v482 = vadd.f32 %v141, %v481
    %483 = vmatmul.f32.gmra.mxu0 %v209
    %v484 = vpop.f32.mrf.mxu0
    %v485 = vadd.f32 %v141, %v484
    %486 = vmatmul.f32.gmra.mxu0 %v212
    %v487 = vpop.f32.mrf.mxu0
    %v488 = vadd.f32 %v141, %v487
    %489 = vmatmul.f32.gmra.mxu0 %v215
    %v490 = vpop.f32.mrf.mxu0
    %v491 = vadd.f32 %v141, %v490
    %492 = vmatmul.f32.gmra.mxu0 %v218
    %v493 = vpop.f32.mrf.mxu0
    %v494 = vadd.f32 %v141, %v493
    %495 = vmatmul.f32.gmra.mxu0 %v221
    %v496 = vpop.f32.mrf.mxu0
    %v497 = vadd.f32 %v141, %v496
    %498 = vdwg.mxu0
    %499 = vmatpush.msra.mxu0 0.0
    %500 = vmatpush.msra.mxu0 0.0
    %501 = vmatpush.msra.mxu0 0.0
    %502 = vmatpush.msra.mxu0 0.0
    %503 = vmatpush.msra.mxu0 0.0
    %504 = vmatpush.msra.mxu0 0.0
    %505 = vmatpush.msra.mxu0 0.0
    %506 = vmatpush.msra.mxu0 0.0
    %507 = vmatpush.msra.mxu0 %v136
    %508 = vmatpush.msra.mxu0 %v132
    %509 = vmatpush.msra.mxu0 %v128
    %510 = vmatpush.msra.mxu0 %v124
    %511 = vmatpush.msra.mxu0 %v120
    %512 = vmatpush.msra.mxu0 %v116
    %513 = vmatpush.msra.mxu0 %v112
    %514 = vmatpush.msra.mxu0 %v108
    %515 = vmatmul.f32.gmra.mxu0 %v149
    %v516 = vpop.f32.mrf.mxu0
    %v517 = vadd.f32 %v142, %v516
    %518 = vmatmul.f32.gmra.mxu0 %v152
    %v519 = vpop.f32.mrf.mxu0
    %v520 = vadd.f32 %v142, %v519
    %521 = vmatmul.f32.gmra.mxu0 %v155
    %v522 = vpop.f32.mrf.mxu0
    %v523 = vadd.f32 %v142, %v522
    %524 = vmatmul.f32.gmra.mxu0 %v158
    %v525 = vpop.f32.mrf.mxu0
    %v526 = vadd.f32 %v142, %v525
    %527 = vmatmul.f32.gmra.mxu0 %v161
    %v528 = vpop.f32.mrf.mxu0
    %v529 = vadd.f32 %v142, %v528
    %530 = vmatmul.f32.gmra.mxu0 %v164
    %v531 = vpop.f32.mrf.mxu0
    %v532 = vadd.f32 %v142, %v531
    %533 = vmatmul.f32.gmra.mxu0 %v167
    %v534 = vpop.f32.mrf.mxu0
    %v535 = vadd.f32 %v142, %v534
    %536 = vmatmul.f32.gmra.mxu0 %v170
    %v537 = vpop.f32.mrf.mxu0
    %v538 = vadd.f32 %v142, %v537
    %539 = vmatmul.f32.gmra.mxu0 %v173
    %v540 = vpop.f32.mrf.mxu0
    %v541 = vadd.f32 %v142, %v540
    %542 = vmatmul.f32.gmra.mxu0 %v176
    %v543 = vpop.f32.mrf.mxu0
    %v544 = vadd.f32 %v142, %v543
    %545 = vmatmul.f32.gmra.mxu0 %v179
    %v546 = vpop.f32.mrf.mxu0
    %v547 = vadd.f32 %v142, %v546
    %548 = vmatmul.f32.gmra.mxu0 %v182
    %v549 = vpop.f32.mrf.mxu0
    %v550 = vadd.f32 %v142, %v549
    %551 = vmatmul.f32.gmra.mxu0 %v185
    %v552 = vpop.f32.mrf.mxu0
    %v553 = vadd.f32 %v142, %v552
    %554 = vmatmul.f32.gmra.mxu0 %v188
    %v555 = vpop.f32.mrf.mxu0
    %v556 = vadd.f32 %v142, %v555
    %557 = vmatmul.f32.gmra.mxu0 %v191
    %v558 = vpop.f32.mrf.mxu0
    %v559 = vadd.f32 %v142, %v558
    %560 = vmatmul.f32.gmra.mxu0 %v194
    %v561 = vpop.f32.mrf.mxu0
    %v562 = vadd.f32 %v142, %v561
    %563 = vmatmul.f32.gmra.mxu0 %v197
    %v564 = vpop.f32.mrf.mxu0
    %v565 = vadd.f32 %v142, %v564
    %566 = vmatmul.f32.gmra.mxu0 %v200
    %v567 = vpop.f32.mrf.mxu0
    %v568 = vadd.f32 %v142, %v567
    %569 = vmatmul.f32.gmra.mxu0 %v203
    %v570 = vpop.f32.mrf.mxu0
    %v571 = vadd.f32 %v142, %v570
    %572 = vmatmul.f32.gmra.mxu0 %v206
    %v573 = vpop.f32.mrf.mxu0
    %v574 = vadd.f32 %v142, %v573
    %575 = vmatmul.f32.gmra.mxu0 %v209
    %v576 = vpop.f32.mrf.mxu0
    %v577 = vadd.f32 %v142, %v576
    %578 = vmatmul.f32.gmra.mxu0 %v212
    %v579 = vpop.f32.mrf.mxu0
    %v580 = vadd.f32 %v142, %v579
    %581 = vmatmul.f32.gmra.mxu0 %v215
    %v582 = vpop.f32.mrf.mxu0
    %v583 = vadd.f32 %v142, %v582
    %584 = vmatmul.f32.gmra.mxu0 %v218
    %v585 = vpop.f32.mrf.mxu0
    %v586 = vadd.f32 %v142, %v585
    %587 = vmatmul.f32.gmra.mxu0 %v221
    %v588 = vpop.f32.mrf.mxu0
    %v589 = vadd.f32 %v142, %v588
    %590 = vdwg.mxu0
    %v591 = vmax.f32 %v241, 0.0
    %v592 = vmax.f32 %v333, 0.0
    %v593 = vmax.f32 %v425, 0.0
    %v594 = vmax.f32 %v517, 0.0
    %v595 = vmax.f32 %v244, 0.0
    %v596 = vmax.f32 %v336, 0.0
    %v597 = vmax.f32 %v428, 0.0
    %v598 = vmax.f32 %v520, 0.0
    %v599 = vmax.f32 %v247, 0.0
    %v600 = vmax.f32 %v339, 0.0
    %v601 = vmax.f32 %v431, 0.0
    %v602 = vmax.f32 %v523, 0.0
    %v603 = vmax.f32 %v250, 0.0
    %v604 = vmax.f32 %v342, 0.0
    %v605 = vmax.f32 %v434, 0.0
    %v606 = vmax.f32 %v526, 0.0
    %v607 = vmax.f32 %v253, 0.0
    %v608 = vmax.f32 %v345, 0.0
    %v609 = vmax.f32 %v437, 0.0
    %v610 = vmax.f32 %v529, 0.0
    %v611 = vmax.f32 %v256, 0.0
    %v612 = vmax.f32 %v348, 0.0
    %v613 = vmax.f32 %v440, 0.0
    %v614 = vmax.f32 %v532, 0.0
    %v615 = vmax.f32 %v259, 0.0
    %v616 = vmax.f32 %v351, 0.0
    %v617 = vmax.f32 %v443, 0.0
    %v618 = vmax.f32 %v535, 0.0
    %v619 = vmax.f32 %v262, 0.0
    %v620 = vmax.f32 %v354, 0.0
    %v621 = vmax.f32 %v446, 0.0
    %v622 = vmax.f32 %v538, 0.0
    %v623 = vmax.f32 %v265, 0.0
    %v624 = vmax.f32 %v357, 0.0
    %v625 = vmax.f32 %v449, 0.0
    %v626 = vmax.f32 %v541, 0.0
    %v627 = vmax.f32 %v268, 0.0
    %v628 = vmax.f32 %v360, 0.0
    %v629 = vmax.f32 %v452, 0.0
    %v630 = vmax.f32 %v544, 0.0
    %v631 = vmax.f32 %v271, 0.0
    %v632 = vmax.f32 %v363, 0.0
    %v633 = vmax.f32 %v455, 0.0
    %v634 = vmax.f32 %v547, 0.0
    %v635 = vmax.f32 %v274, 0.0
    %v636 = vmax.f32 %v366, 0.0
    %v637 = vmax.f32 %v458, 0.0
    %v638 = vmax.f32 %v550, 0.0
    %v639 = vmax.f32 %v277, 0.0
    %v640 = vmax.f32 %v369, 0.0
    %v641 = vmax.f32 %v461, 0.0
    %v642 = vmax.f32 %v553, 0.0
    %v643 = vmax.f32 %v280, 0.0
    %v644 = vmax.f32 %v372, 0.0
    %v645 = vmax.f32 %v464, 0.0
    %v646 = vmax.f32 %v556, 0.0
    %v647 = vmax.f32 %v283, 0.0
    %v648 = vmax.f32 %v375, 0.0
    %v649 = vmax.f32 %v467, 0.0
    %v650 = vmax.f32 %v559, 0.0
    %v651 = vmax.f32 %v286, 0.0
    %v652 = vmax.f32 %v378, 0.0
    %v653 = vmax.f32 %v470, 0.0
    %v654 = vmax.f32 %v562, 0.0
    %v655 = vmax.f32 %v289, 0.0
    %v656 = vmax.f32 %v381, 0.0
    %v657 = vmax.f32 %v473, 0.0
    %v658 = vmax.f32 %v565, 0.0
    %v659 = vmax.f32 %v292, 0.0
    %v660 = vmax.f32 %v384, 0.0
    %v661 = vmax.f32 %v476, 0.0
    %v662 = vmax.f32 %v568, 0.0
    %v663 = vmax.f32 %v295, 0.0
    %v664 = vmax.f32 %v387, 0.0
    %v665 = vmax.f32 %v479, 0.0
    %v666 = vmax.f32 %v571, 0.0
    %v667 = vmax.f32 %v298, 0.0
    %v668 = vmax.f32 %v390, 0.0
    %v669 = vmax.f32 %v482, 0.0
    %v670 = vmax.f32 %v574, 0.0
    %v671 = vmax.f32 %v301, 0.0
    %v672 = vmax.f32 %v393, 0.0
    %v673 = vmax.f32 %v485, 0.0
    %v674 = vmax.f32 %v577, 0.0
    %v675 = vmax.f32 %v304, 0.0
    %v676 = vmax.f32 %v396, 0.0
    %v677 = vmax.f32 %v488, 0.0
    %v678 = vmax.f32 %v580, 0.0
    %v679 = vmax.f32 %v307, 0.0
    %v680 = vmax.f32 %v399, 0.0
    %v681 = vmax.f32 %v491, 0.0
    %v682 = vmax.f32 %v583, 0.0
    %v683 = vmax.f32 %v310, 0.0
    %v684 = vmax.f32 %v402, 0.0
    %v685 = vmax.f32 %v494, 0.0
    %v686 = vmax.f32 %v586, 0.0
    %v687 = vmax.f32 %v313, 0.0
    %v688 = vmax.f32 %v405, 0.0
    %v689 = vmax.f32 %v497, 0.0
    %v690 = vmax.f32 %v589, 0.0
    %v691 = vld [vmem:[#allocation2] sm:$0xff]
    %v692 = vld [vmem:[#allocation2 + $0x8] sm:$0xff]
    %v693 = vld [vmem:[#allocation2 + $0x10] sm:$0xff]
    %v694 = vld [vmem:[#allocation2 + $0x18] sm:$0xff]
    %v695 = vld [vmem:[#allocation2 + $0x20] sm:$0xff]
    %v696 = vld [vmem:[#allocation2 + $0x28] sm:$0xff]
    %v697 = vld [vmem:[#allocation2 + $0x30] sm:$0xff]
    %v698 = vld [vmem:[#allocation2 + $0x38] sm:$0xff]
    %v699 = vld [vmem:[#allocation2 + $0x40] sm:$0xff]
    %v700 = vld [vmem:[#allocation2 + $0x48] sm:$0xff]
    %v701 = vld [vmem:[#allocation2 + $0x50] sm:$0xff]
    %v702 = vld [vmem:[#allocation2 + $0x58] sm:$0xff]
    %v703 = vld [vmem:[#allocation2 + $0x60] sm:$0xff]
    %v704 = vld [vmem:[#allocation2 + $0x68] sm:$0xff]
    %v705 = vld [vmem:[#allocation2 + $0x70] sm:$0xff]
    %v706 = vld [vmem:[#allocation2 + $0x78] sm:$0xff]
    %v707 = vld [vmem:[#allocation2 + $0x80] sm:$0xff]
    %v708 = vld [vmem:[#allocation2 + $0x88] sm:$0xff]
    %v709 = vld [vmem:[#allocation2 + $0x90] sm:$0xff]
    %v710 = vld [vmem:[#allocation2 + $0x98] sm:$0xff]
    %v711 = vld [vmem:[#allocation2 + $0xa0] sm:$0xff]
    %v712 = vld [vmem:[#allocation2 + $0xa8] sm:$0xff]
    %v713 = vld [vmem:[#allocation2 + $0xb0] sm:$0xff]
    %v714 = vld [vmem:[#allocation2 + $0xb8] sm:$0xff]
    %v715 = vld [vmem:[#allocation2 + $0xc0] sm:$0xff]
    %v716 = vld [vmem:[#allocation2 + $0xc8] sm:$0xff]
    %v717 = vld [vmem:[#allocation2 + $0xd0] sm:$0xff]
    %v718 = vld [vmem:[#allocation2 + $0xd8] sm:$0xff]
    %v719 = vld [vmem:[#allocation2 + $0xe0] sm:$0xff]
    %v720 = vld [vmem:[#allocation2 + $0xe8] sm:$0xff]
    %v721 = vld [vmem:[#allocation2 + $0xf0] sm:$0xff]
    %v722 = vld [vmem:[#allocation2 + $0xf8] sm:$0xff]
    %v723 = vld [vmem:[#allocation2 + $0x100] sm:$0xff]
    %v724 = vld [vmem:[#allocation2 + $0x108] sm:$0xff]
    %v725 = vld [vmem:[#allocation2 + $0x110] sm:$0xff]
    %v726 = vld [vmem:[#allocation2 + $0x118] sm:$0xff]
    %v727 = vld [vmem:[#allocation2 + $0x120] sm:$0xff]
    %v728 = vld [vmem:[#allocation2 + $0x128] sm:$0xff]
    %v729 = vld [vmem:[#allocation2 + $0x130] sm:$0xff]
    %v730 = vld [vmem:[#allocation2 + $0x138] sm:$0xff]
    %v731 = vld [vmem:[#allocation2 + $0x140] sm:$0xff]
    %v732 = vld [vmem:[#allocation2 + $0x148] sm:$0xff]
    %v733 = vld [vmem:[#allocation2 + $0x150] sm:$0xff]
    %v734 = vld [vmem:[#allocation2 + $0x158] sm:$0xff]
    %v735 = vld [vmem:[#allocation2 + $0x160] sm:$0xff]
    %v736 = vld [vmem:[#allocation2 + $0x168] sm:$0xff]
    %v737 = vld [vmem:[#allocation2 + $0x170] sm:$0xff]
    %v738 = vld [vmem:[#allocation2 + $0x178] sm:$0xff]
    %v739 = vld [vmem:[#allocation2 + $0x180] sm:$0xff]
    %v740 = vld [vmem:[#allocation2 + $0x188] sm:$0xff]
    %v741 = vld [vmem:[#allocation2 + $0x190] sm:$0xff]
    %v742 = vld [vmem:[#allocation2 + $0x198] sm:$0xff]
    %v743 = vld [vmem:[#allocation2 + $0x1a0] sm:$0xff]
    %v744 = vld [vmem:[#allocation2 + $0x1a8] sm:$0xff]
    %v745 = vld [vmem:[#allocation2 + $0x1b0] sm:$0xff]
    %v746 = vld [vmem:[#allocation2 + $0x1b8] sm:$0xff]
    %v747 = vld [vmem:[#allocation2 + $0x1c0] sm:$0xff]
    %v748 = vld [vmem:[#allocation2 + $0x1c8] sm:$0xff]
    %v749 = vld [vmem:[#allocation2 + $0x1d0] sm:$0xff]
    %v750 = vld [vmem:[#allocation2 + $0x1d8] sm:$0xff]
    %v751 = vld [vmem:[#allocation2 + $0x1e0] sm:$0xff]
    %v752 = vld [vmem:[#allocation2 + $0x1e8] sm:$0xff]
    %v753 = vld [vmem:[#allocation2 + $0x1f0] sm:$0xff]
    %v754 = vld [vmem:[#allocation2 + $0x1f8] sm:$0xff]
    %v755 = vld [vmem:[#allocation2 + $0x200] sm:$0xff]
    %v756 = vld [vmem:[#allocation2 + $0x208] sm:$0xff]
    %v757 = vld [vmem:[#allocation2 + $0x210] sm:$0xff]
    %v758 = vld [vmem:[#allocation2 + $0x218] sm:$0xff]
    %v759 = vld [vmem:[#allocation2 + $0x220] sm:$0xff]
    %v760 = vld [vmem:[#allocation2 + $0x228] sm:$0xff]
    %v761 = vld [vmem:[#allocation2 + $0x230] sm:$0xff]
    %v762 = vld [vmem:[#allocation2 + $0x238] sm:$0xff]
    %v763 = vld [vmem:[#allocation2 + $0x240] sm:$0xff]
    %v764 = vld [vmem:[#allocation2 + $0x248] sm:$0xff]
    %v765 = vld [vmem:[#allocation2 + $0x250] sm:$0xff]
    %v766 = vld [vmem:[#allocation2 + $0x258] sm:$0xff]
    %v767 = vld [vmem:[#allocation2 + $0x260] sm:$0xff]
    %v768 = vld [vmem:[#allocation2 + $0x268] sm:$0xff]
    %v769 = vld [vmem:[#allocation2 + $0x270] sm:$0xff]
    %v770 = vld [vmem:[#allocation2 + $0x278] sm:$0xff]
    %v771 = vld [vmem:[#allocation2 + $0x280] sm:$0xff]
    %v772 = vld [vmem:[#allocation2 + $0x288] sm:$0xff]
    %v773 = vld [vmem:[#allocation2 + $0x290] sm:$0xff]
    %v774 = vld [vmem:[#allocation2 + $0x298] sm:$0xff]
    %v775 = vld [vmem:[#allocation2 + $0x2a0] sm:$0xff]
    %v776 = vld [vmem:[#allocation2 + $0x2a8] sm:$0xff]
    %v777 = vld [vmem:[#allocation2 + $0x2b0] sm:$0xff]
    %v778 = vld [vmem:[#allocation2 + $0x2b8] sm:$0xff]
    %v779 = vld [vmem:[#allocation2 + $0x2c0] sm:$0xff]
    %v780 = vld [vmem:[#allocation2 + $0x2c8] sm:$0xff]
    %v781 = vld [vmem:[#allocation2 + $0x2d0] sm:$0xff]
    %v782 = vld [vmem:[#allocation2 + $0x2d8] sm:$0xff]
    %v783 = vld [vmem:[#allocation2 + $0x2e0] sm:$0xff]
    %v784 = vld [vmem:[#allocation2 + $0x2e8] sm:$0xff]
    %v785 = vld [vmem:[#allocation2 + $0x2f0] sm:$0xff]
    %v786 = vld [vmem:[#allocation2 + $0x2f8] sm:$0xff]
    %v787 = vld [vmem:[#allocation2 + $0x300] sm:$0xff]
    %v788 = vld [vmem:[#allocation2 + $0x308] sm:$0xff]
    %v789 = vld [vmem:[#allocation2 + $0x310] sm:$0xff]
    %v790 = vld [vmem:[#allocation2 + $0x318] sm:$0xff]
    %v791 = vld [vmem:[#allocation2 + $0x320] sm:$0xff]
    %v792 = vld [vmem:[#allocation2 + $0x328] sm:$0xff]
    %v793 = vld [vmem:[#allocation2 + $0x330] sm:$0xff]
    %v794 = vld [vmem:[#allocation2 + $0x338] sm:$0xff]
    %v795 = vld [vmem:[#allocation2 + $0x340] sm:$0xff]
    %v796 = vld [vmem:[#allocation2 + $0x348] sm:$0xff]
    %v797 = vld [vmem:[#allocation2 + $0x350] sm:$0xff]
    %v798 = vld [vmem:[#allocation2 + $0x358] sm:$0xff]
    %v799 = vld [vmem:[#allocation2 + $0x360] sm:$0xff]
    %v800 = vld [vmem:[#allocation2 + $0x368] sm:$0xff]
    %v801 = vld [vmem:[#allocation2 + $0x370] sm:$0xff]
    %v802 = vld [vmem:[#allocation2 + $0x378] sm:$0xff]
    %v803 = vld [vmem:[#allocation2 + $0x380] sm:$0xff]
    %v804 = vld [vmem:[#allocation2 + $0x388] sm:$0xff]
    %v805 = vld [vmem:[#allocation2 + $0x390] sm:$0xff]
    %v806 = vld [vmem:[#allocation2 + $0x398] sm:$0xff]
    %v807 = vld [vmem:[#allocation2 + $0x3a0] sm:$0xff]
    %v808 = vld [vmem:[#allocation2 + $0x3a8] sm:$0xff]
    %v809 = vld [vmem:[#allocation2 + $0x3b0] sm:$0xff]
    %v810 = vld [vmem:[#allocation2 + $0x3b8] sm:$0xff]
    %v811 = vld [vmem:[#allocation2 + $0x3c0] sm:$0xff]
    %v812 = vld [vmem:[#allocation2 + $0x3c8] sm:$0xff]
    %v813 = vld [vmem:[#allocation2 + $0x3d0] sm:$0xff]
    %v814 = vld [vmem:[#allocation2 + $0x3d8] sm:$0xff]
    %v815 = vld [vmem:[#allocation2 + $0x3e0] sm:$0xff]
    %v816 = vld [vmem:[#allocation2 + $0x3e8] sm:$0xff]
    %v817 = vld [vmem:[#allocation2 + $0x3f0] sm:$0xff]
    %v818 = vld [vmem:[#allocation2 + $0x3f8] sm:$0xff]
    %v819 = vld [vmem:[%s4] sm:$0x3]
    %v821 = vperm.slane %v819, 0
    %v822 = vperm.slane %v819, 1
    %825 = vmatpush.msra.mxu0 %v721
    %826 = vmatpush.msra.mxu0 %v719
    %827 = vmatpush.msra.mxu0 %v717
    %828 = vmatpush.msra.mxu0 %v715
    %829 = vmatpush.msra.mxu0 %v713
    %830 = vmatpush.msra.mxu0 %v711
    %831 = vmatpush.msra.mxu0 %v709
    %832 = vmatpush.msra.mxu0 %v707
    %833 = vmatpush.msra.mxu0 %v705
    %834 = vmatpush.msra.mxu0 %v703
    %835 = vmatpush.msra.mxu0 %v701
    %836 = vmatpush.msra.mxu0 %v699
    %837 = vmatpush.msra.mxu0 %v697
    %838 = vmatpush.msra.mxu0 %v695
    %839 = vmatpush.msra.mxu0 %v693
    %840 = vmatpush.msra.mxu0 %v691
    %841 = vmatmul.f32.gmra.mxu0 %v591
    %v842 = vpop.f32.mrf.mxu0
    %v843 = vadd.f32 %v821, %v842
    %844 = vmatmul.f32.gmra.mxu0 %v595
    %v845 = vpop.f32.mrf.mxu0
    %v846 = vadd.f32 %v821, %v845
    %847 = vmatmul.f32.gmra.mxu0 %v599
    %v848 = vpop.f32.mrf.mxu0
    %v849 = vadd.f32 %v821, %v848
    %850 = vmatmul.f32.gmra.mxu0 %v603
    %v851 = vpop.f32.mrf.mxu0
    %v852 = vadd.f32 %v821, %v851
    %853 = vmatmul.f32.gmra.mxu0 %v607
    %v854 = vpop.f32.mrf.mxu0
    %v855 = vadd.f32 %v821, %v854
    %856 = vmatmul.f32.gmra.mxu0 %v611
    %v857 = vpop.f32.mrf.mxu0
    %v858 = vadd.f32 %v821, %v857
    %859 = vmatmul.f32.gmra.mxu0 %v615
    %v860 = vpop.f32.mrf.mxu0
    %v861 = vadd.f32 %v821, %v860
    %862 = vmatmul.f32.gmra.mxu0 %v619
    %v863 = vpop.f32.mrf.mxu0
    %v864 = vadd.f32 %v821, %v863
    %865 = vmatmul.f32.gmra.mxu0 %v623
    %v866 = vpop.f32.mrf.mxu0
    %v867 = vadd.f32 %v821, %v866
    %868 = vmatmul.f32.gmra.mxu0 %v627
    %v869 = vpop.f32.mrf.mxu0
    %v870 = vadd.f32 %v821, %v869
    %871 = vmatmul.f32.gmra.mxu0 %v631
    %v872 = vpop.f32.mrf.mxu0
    %v873 = vadd.f32 %v821, %v872
    %874 = vmatmul.f32.gmra.mxu0 %v635
    %v875 = vpop.f32.mrf.mxu0
    %v876 = vadd.f32 %v821, %v875
    %877 = vmatmul.f32.gmra.mxu0 %v639
    %v878 = vpop.f32.mrf.mxu0
    %v879 = vadd.f32 %v821, %v878
    %880 = vmatmul.f32.gmra.mxu0 %v643
    %v881 = vpop.f32.mrf.mxu0
    %v882 = vadd.f32 %v821, %v881
    %883 = vmatmul.f32.gmra.mxu0 %v647
    %v884 = vpop.f32.mrf.mxu0
    %v885 = vadd.f32 %v821, %v884
    %886 = vmatmul.f32.gmra.mxu0 %v651
    %v887 = vpop.f32.mrf.mxu0
    %v888 = vadd.f32 %v821, %v887
    %889 = vmatmul.f32.gmra.mxu0 %v655
    %v890 = vpop.f32.mrf.mxu0
    %v891 = vadd.f32 %v821, %v890
    %892 = vmatmul.f32.gmra.mxu0 %v659
    %v893 = vpop.f32.mrf.mxu0
    %v894 = vadd.f32 %v821, %v893
    %895 = vmatmul.f32.gmra.mxu0 %v663
    %v896 = vpop.f32.mrf.mxu0
    %v897 = vadd.f32 %v821, %v896
    %898 = vmatmul.f32.gmra.mxu0 %v667
    %v899 = vpop.f32.mrf.mxu0
    %v900 = vadd.f32 %v821, %v899
    %901 = vmatmul.f32.gmra.mxu0 %v671
    %v902 = vpop.f32.mrf.mxu0
    %v903 = vadd.f32 %v821, %v902
    %904 = vmatmul.f32.gmra.mxu0 %v675
    %v905 = vpop.f32.mrf.mxu0
    %v906 = vadd.f32 %v821, %v905
    %907 = vmatmul.f32.gmra.mxu0 %v679
    %v908 = vpop.f32.mrf.mxu0
    %v909 = vadd.f32 %v821, %v908
    %910 = vmatmul.f32.gmra.mxu0 %v683
    %v911 = vpop.f32.mrf.mxu0
    %v912 = vadd.f32 %v821, %v911
    %913 = vmatmul.f32.gmra.mxu0 %v687
    %v914 = vpop.f32.mrf.mxu0
    %v915 = vadd.f32 %v821, %v914
    %916 = vdwg.mxu0
    %917 = vmatpush.msra.mxu0 %v753
    %918 = vmatpush.msra.mxu0 %v751
    %919 = vmatpush.msra.mxu0 %v749
    %920 = vmatpush.msra.mxu0 %v747
    %921 = vmatpush.msra.mxu0 %v745
    %922 = vmatpush.msra.mxu0 %v743
    %923 = vmatpush.msra.mxu0 %v741
    %924 = vmatpush.msra.mxu0 %v739
    %925 = vmatpush.msra.mxu0 %v737
    %926 = vmatpush.msra.mxu0 %v735
    %927 = vmatpush.msra.mxu0 %v733
    %928 = vmatpush.msra.mxu0 %v731
    %929 = vmatpush.msra.mxu0 %v729
    %930 = vmatpush.msra.mxu0 %v727
    %931 = vmatpush.msra.mxu0 %v725
    %932 = vmatpush.msra.mxu0 %v723
    %933 = vmatmul.f32.gmra.mxu0 %v592
    %v934 = vpop.f32.mrf.mxu0
    %v935 = vadd.f32 %v843, %v934
    %936 = vmatmul.f32.gmra.mxu0 %v596
    %v937 = vpop.f32.mrf.mxu0
    %v938 = vadd.f32 %v846, %v937
    %939 = vmatmul.f32.gmra.mxu0 %v600
    %v940 = vpop.f32.mrf.mxu0
    %v941 = vadd.f32 %v849, %v940
    %942 = vmatmul.f32.gmra.mxu0 %v604
    %v943 = vpop.f32.mrf.mxu0
    %v944 = vadd.f32 %v852, %v943
    %945 = vmatmul.f32.gmra.mxu0 %v608
    %v946 = vpop.f32.mrf.mxu0
    %v947 = vadd.f32 %v855, %v946
    %948 = vmatmul.f32.gmra.mxu0 %v612
    %v949 = vpop.f32.mrf.mxu0
    %v950 = vadd.f32 %v858, %v949
    %951 = vmatmul.f32.gmra.mxu0 %v616
    %v952 = vpop.f32.mrf.mxu0
    %v953 = vadd.f32 %v861, %v952
    %954 = vmatmul.f32.gmra.mxu0 %v620
    %v955 = vpop.f32.mrf.mxu0
    %v956 = vadd.f32 %v864, %v955
    %957 = vmatmul.f32.gmra.mxu0 %v624
    %v958 = vpop.f32.mrf.mxu0
    %v959 = vadd.f32 %v867, %v958
    %960 = vmatmul.f32.gmra.mxu0 %v628
    %v961 = vpop.f32.mrf.mxu0
    %v962 = vadd.f32 %v870, %v961
    %963 = vmatmul.f32.gmra.mxu0 %v632
    %v964 = vpop.f32.mrf.mxu0
    %v965 = vadd.f32 %v873, %v964
    %966 = vmatmul.f32.gmra.mxu0 %v636
    %v967 = vpop.f32.mrf.mxu0
    %v968 = vadd.f32 %v876, %v967
    %969 = vmatmul.f32.gmra.mxu0 %v640
    %v970 = vpop.f32.mrf.mxu0
    %v971 = vadd.f32 %v879, %v970
    %972 = vmatmul.f32.gmra.mxu0 %v644
    %v973 = vpop.f32.mrf.mxu0
    %v974 = vadd.f32 %v882, %v973
    %975 = vmatmul.f32.gmra.mxu0 %v648
    %v976 = vpop.f32.mrf.mxu0
    %v977 = vadd.f32 %v885, %v976
    %978 = vmatmul.f32.gmra.mxu0 %v652
    %v979 = vpop.f32.mrf.mxu0
    %v980 = vadd.f32 %v888, %v979
    %981 = vmatmul.f32.gmra.mxu0 %v656
    %v982 = vpop.f32.mrf.mxu0
    %v983 = vadd.f32 %v891, %v982
    %984 = vmatmul.f32.gmra.mxu0 %v660
    %v985 = vpop.f32.mrf.mxu0
    %v986 = vadd.f32 %v894, %v985
    %987 = vmatmul.f32.gmra.mxu0 %v664
    %v988 = vpop.f32.mrf.mxu0
    %v989 = vadd.f32 %v897, %v988
    %990 = vmatmul.f32.gmra.mxu0 %v668
    %v991 = vpop.f32.mrf.mxu0
    %v992 = vadd.f32 %v900, %v991
    %993 = vmatmul.f32.gmra.mxu0 %v672
    %v994 = vpop.f32.mrf.mxu0
    %v995 = vadd.f32 %v903, %v994
    %996 = vmatmul.f32.gmra.mxu0 %v676
    %v997 = vpop.f32.mrf.mxu0
    %v998 = vadd.f32 %v906, %v997
    %999 = vmatmul.f32.gmra.mxu0 %v680
    %v1000 = vpop.f32.mrf.mxu0
    %v1001 = vadd.f32 %v909, %v1000
    %1002 = vmatmul.f32.gmra.mxu0 %v684
    %v1003 = vpop.f32.mrf.mxu0
    %v1004 = vadd.f32 %v912, %v1003
    %1005 = vmatmul.f32.gmra.mxu0 %v688
    %v1006 = vpop.f32.mrf.mxu0
    %v1007 = vadd.f32 %v915, %v1006
    %1008 = vdwg.mxu0
    %1009 = vmatpush.msra.mxu0 %v785
    %1010 = vmatpush.msra.mxu0 %v783
    %1011 = vmatpush.msra.mxu0 %v781
    %1012 = vmatpush.msra.mxu0 %v779
    %1013 = vmatpush.msra.mxu0 %v777
    %1014 = vmatpush.msra.mxu0 %v775
    %1015 = vmatpush.msra.mxu0 %v773
    %1016 = vmatpush.msra.mxu0 %v771
    %1017 = vmatpush.msra.mxu0 %v769
    %1018 = vmatpush.msra.mxu0 %v767
    %1019 = vmatpush.msra.mxu0 %v765
    %1020 = vmatpush.msra.mxu0 %v763
    %1021 = vmatpush.msra.mxu0 %v761
    %1022 = vmatpush.msra.mxu0 %v759
    %1023 = vmatpush.msra.mxu0 %v757
    %1024 = vmatpush.msra.mxu0 %v755
    %1025 = vmatmul.f32.gmra.mxu0 %v593
    %v1026 = vpop.f32.mrf.mxu0
    %v1027 = vadd.f32 %v935, %v1026
    %1028 = vmatmul.f32.gmra.mxu0 %v597
    %v1029 = vpop.f32.mrf.mxu0
    %v1030 = vadd.f32 %v938, %v1029
    %1031 = vmatmul.f32.gmra.mxu0 %v601
    %v1032 = vpop.f32.mrf.mxu0
    %v1033 = vadd.f32 %v941, %v1032
    %1034 = vmatmul.f32.gmra.mxu0 %v605
    %v1035 = vpop.f32.mrf.mxu0
    %v1036 = vadd.f32 %v944, %v1035
    %1037 = vmatmul.f32.gmra.mxu0 %v609
    %v1038 = vpop.f32.mrf.mxu0
    %v1039 = vadd.f32 %v947, %v1038
    %1040 = vmatmul.f32.gmra.mxu0 %v613
    %v1041 = vpop.f32.mrf.mxu0
    %v1042 = vadd.f32 %v950, %v1041
    %1043 = vmatmul.f32.gmra.mxu0 %v617
    %v1044 = vpop.f32.mrf.mxu0
    %v1045 = vadd.f32 %v953, %v1044
    %1046 = vmatmul.f32.gmra.mxu0 %v621
    %v1047 = vpop.f32.mrf.mxu0
    %v1048 = vadd.f32 %v956, %v1047
    %1049 = vmatmul.f32.gmra.mxu0 %v625
    %v1050 = vpop.f32.mrf.mxu0
    %v1051 = vadd.f32 %v959, %v1050
    %1052 = vmatmul.f32.gmra.mxu0 %v629
    %v1053 = vpop.f32.mrf.mxu0
    %v1054 = vadd.f32 %v962, %v1053
    %1055 = vmatmul.f32.gmra.mxu0 %v633
    %v1056 = vpop.f32.mrf.mxu0
    %v1057 = vadd.f32 %v965, %v1056
    %1058 = vmatmul.f32.gmra.mxu0 %v637
    %v1059 = vpop.f32.mrf.mxu0
    %v1060 = vadd.f32 %v968, %v1059
    %1061 = vmatmul.f32.gmra.mxu0 %v641
    %v1062 = vpop.f32.mrf.mxu0
    %v1063 = vadd.f32 %v971, %v1062
    %1064 = vmatmul.f32.gmra.mxu0 %v645
    %v1065 = vpop.f32.mrf.mxu0
    %v1066 = vadd.f32 %v974, %v1065
    %1067 = vmatmul.f32.gmra.mxu0 %v649
    %v1068 = vpop.f32.mrf.mxu0
    %v1069 = vadd.f32 %v977, %v1068
    %1070 = vmatmul.f32.gmra.mxu0 %v653
    %v1071 = vpop.f32.mrf.mxu0
    %v1072 = vadd.f32 %v980, %v1071
    %1073 = vmatmul.f32.gmra.mxu0 %v657
    %v1074 = vpop.f32.mrf.mxu0
    %v1075 = vadd.f32 %v983, %v1074
    %1076 = vmatmul.f32.gmra.mxu0 %v661
    %v1077 = vpop.f32.mrf.mxu0
    %v1078 = vadd.f32 %v986, %v1077
    %1079 = vmatmul.f32.gmra.mxu0 %v665
    %v1080 = vpop.f32.mrf.mxu0
    %v1081 = vadd.f32 %v989, %v1080
    %1082 = vmatmul.f32.gmra.mxu0 %v669
    %v1083 = vpop.f32.mrf.mxu0
    %v1084 = vadd.f32 %v992, %v1083
    %1085 = vmatmul.f32.gmra.mxu0 %v673
    %v1086 = vpop.f32.mrf.mxu0
    %v1087 = vadd.f32 %v995, %v1086
    %1088 = vmatmul.f32.gmra.mxu0 %v677
    %v1089 = vpop.f32.mrf.mxu0
    %v1090 = vadd.f32 %v998, %v1089
    %1091 = vmatmul.f32.gmra.mxu0 %v681
    %v1092 = vpop.f32.mrf.mxu0
    %v1093 = vadd.f32 %v1001, %v1092
    %1094 = vmatmul.f32.gmra.mxu0 %v685
    %v1095 = vpop.f32.mrf.mxu0
    %v1096 = vadd.f32 %v1004, %v1095
    %1097 = vmatmul.f32.gmra.mxu0 %v689
    %v1098 = vpop.f32.mrf.mxu0
    %v1099 = vadd.f32 %v1007, %v1098
    %1100 = vdwg.mxu0
    %1101 = vmatpush.msra.mxu0 %v817
    %1102 = vmatpush.msra.mxu0 %v815
    %1103 = vmatpush.msra.mxu0 %v813
    %1104 = vmatpush.msra.mxu0 %v811
    %1105 = vmatpush.msra.mxu0 %v809
    %1106 = vmatpush.msra.mxu0 %v807
    %1107 = vmatpush.msra.mxu0 %v805
    %1108 = vmatpush.msra.mxu0 %v803
    %1109 = vmatpush.msra.mxu0 %v801
    %1110 = vmatpush.msra.mxu0 %v799
    %1111 = vmatpush.msra.mxu0 %v797
    %1112 = vmatpush.msra.mxu0 %v795
    %1113 = vmatpush.msra.mxu0 %v793
    %1114 = vmatpush.msra.mxu0 %v791
    %1115 = vmatpush.msra.mxu0 %v789
    %1116 = vmatpush.msra.mxu0 %v787
    %1117 = vmatmul.f32.gmra.mxu0 %v594
    %v1118 = vpop.f32.mrf.mxu0
    %v1119 = vadd.f32 %v1027, %v1118
    %1120 = vmatmul.f32.gmra.mxu0 %v598
    %v1121 = vpop.f32.mrf.mxu0
    %v1122 = vadd.f32 %v1030, %v1121
    %1123 = vmatmul.f32.gmra.mxu0 %v602
    %v1124 = vpop.f32.mrf.mxu0
    %v1125 = vadd.f32 %v1033, %v1124
    %1126 = vmatmul.f32.gmra.mxu0 %v606
    %v1127 = vpop.f32.mrf.mxu0
    %v1128 = vadd.f32 %v1036, %v1127
    %1129 = vmatmul.f32.gmra.mxu0 %v610
    %v1130 = vpop.f32.mrf.mxu0
    %v1131 = vadd.f32 %v1039, %v1130
    %1132 = vmatmul.f32.gmra.mxu0 %v614
    %v1133 = vpop.f32.mrf.mxu0
    %v1134 = vadd.f32 %v1042, %v1133
    %1135 = vmatmul.f32.gmra.mxu0 %v618
    %v1136 = vpop.f32.mrf.mxu0
    %v1137 = vadd.f32 %v1045, %v1136
    %1138 = vmatmul.f32.gmra.mxu0 %v622
    %v1139 = vpop.f32.mrf.mxu0
    %v1140 = vadd.f32 %v1048, %v1139
    %1141 = vmatmul.f32.gmra.mxu0 %v626
    %v1142 = vpop.f32.mrf.mxu0
    %v1143 = vadd.f32 %v1051, %v1142
    %1144 = vmatmul.f32.gmra.mxu0 %v630
    %v1145 = vpop.f32.mrf.mxu0
    %v1146 = vadd.f32 %v1054, %v1145
    %1147 = vmatmul.f32.gmra.mxu0 %v634
    %v1148 = vpop.f32.mrf.mxu0
    %v1149 = vadd.f32 %v1057, %v1148
    %1150 = vmatmul.f32.gmra.mxu0 %v638
    %v1151 = vpop.f32.mrf.mxu0
    %v1152 = vadd.f32 %v1060, %v1151
    %1153 = vmatmul.f32.gmra.mxu0 %v642
    %v1154 = vpop.f32.mrf.mxu0
    %v1155 = vadd.f32 %v1063, %v1154
    %1156 = vmatmul.f32.gmra.mxu0 %v646
    %v1157 = vpop.f32.mrf.mxu0
    %v1158 = vadd.f32 %v1066, %v1157
    %1159 = vmatmul.f32.gmra.mxu0 %v650
    %v1160 = vpop.f32.mrf.mxu0
    %v1161 = vadd.f32 %v1069, %v1160
    %1162 = vmatmul.f32.gmra.mxu0 %v654
    %v1163 = vpop.f32.mrf.mxu0
    %v1164 = vadd.f32 %v1072, %v1163
    %1165 = vmatmul.f32.gmra.mxu0 %v658
    %v1166 = vpop.f32.mrf.mxu0
    %v1167 = vadd.f32 %v1075, %v1166
    %1168 = vmatmul.f32.gmra.mxu0 %v662
    %v1169 = vpop.f32.mrf.mxu0
    %v1170 = vadd.f32 %v1078, %v1169
    %1171 = vmatmul.f32.gmra.mxu0 %v666
    %v1172 = vpop.f32.mrf.mxu0
    %v1173 = vadd.f32 %v1081, %v1172
    %1174 = vmatmul.f32.gmra.mxu0 %v670
    %v1175 = vpop.f32.mrf.mxu0
    %v1176 = vadd.f32 %v1084, %v1175
    %1177 = vmatmul.f32.gmra.mxu0 %v674
    %v1178 = vpop.f32.mrf.mxu0
    %v1179 = vadd.f32 %v1087, %v1178
    %1180 = vmatmul.f32.gmra.mxu0 %v678
    %v1181 = vpop.f32.mrf.mxu0
    %v1182 = vadd.f32 %v1090, %v1181
    %1183 = vmatmul.f32.gmra.mxu0 %v682
    %v1184 = vpop.f32.mrf.mxu0
    %v1185 = vadd.f32 %v1093, %v1184
    %1186 = vmatmul.f32.gmra.mxu0 %v686
    %v1187 = vpop.f32.mrf.mxu0
    %v1188 = vadd.f32 %v1096, %v1187
    %1189 = vmatmul.f32.gmra.mxu0 %v690
    %v1190 = vpop.f32.mrf.mxu0
    %v1191 = vadd.f32 %v1099, %v1190
    %1192 = vdwg.mxu0
    %1193 = vmatpush.msra.mxu0 %v722
    %1194 = vmatpush.msra.mxu0 %v720
    %1195 = vmatpush.msra.mxu0 %v718
    %1196 = vmatpush.msra.mxu0 %v716
    %1197 = vmatpush.msra.mxu0 %v714
    %1198 = vmatpush.msra.mxu0 %v712
    %1199 = vmatpush.msra.mxu0 %v710
    %1200 = vmatpush.msra.mxu0 %v708
    %1201 = vmatpush.msra.mxu0 %v706
    %1202 = vmatpush.msra.mxu0 %v704
    %1203 = vmatpush.msra.mxu0 %v702
    %1204 = vmatpush.msra.mxu0 %v700
    %1205 = vmatpush.msra.mxu0 %v698
    %1206 = vmatpush.msra.mxu0 %v696
    %1207 = vmatpush.msra.mxu0 %v694
    %1208 = vmatpush.msra.mxu0 %v692
    %1209 = vmatmul.f32.gmra.mxu0 %v591
    %v1210 = vpop.f32.mrf.mxu0
    %v1211 = vadd.f32 %v822, %v1210
    %1212 = vmatmul.f32.gmra.mxu0 %v595
    %v1213 = vpop.f32.mrf.mxu0
    %v1214 = vadd.f32 %v822, %v1213
    %1215 = vmatmul.f32.gmra.mxu0 %v599
    %v1216 = vpop.f32.mrf.mxu0
    %v1217 = vadd.f32 %v822, %v1216
    %1218 = vmatmul.f32.gmra.mxu0 %v603
    %v1219 = vpop.f32.mrf.mxu0
    %v1220 = vadd.f32 %v822, %v1219
    %1221 = vmatmul.f32.gmra.mxu0 %v607
    %v1222 = vpop.f32.mrf.mxu0
    %v1223 = vadd.f32 %v822, %v1222
    %1224 = vmatmul.f32.gmra.mxu0 %v611
    %v1225 = vpop.f32.mrf.mxu0
    %v1226 = vadd.f32 %v822, %v1225
    %1227 = vmatmul.f32.gmra.mxu0 %v615
    %v1228 = vpop.f32.mrf.mxu0
    %v1229 = vadd.f32 %v822, %v1228
    %1230 = vmatmul.f32.gmra.mxu0 %v619
    %v1231 = vpop.f32.mrf.mxu0
    %v1232 = vadd.f32 %v822, %v1231
    %1233 = vmatmul.f32.gmra.mxu0 %v623
    %v1234 = vpop.f32.mrf.mxu0
    %v1235 = vadd.f32 %v822, %v1234
    %1236 = vmatmul.f32.gmra.mxu0 %v627
    %v1237 = vpop.f32.mrf.mxu0
    %v1238 = vadd.f32 %v822, %v1237
    %1239 = vmatmul.f32.gmra.mxu0 %v631
    %v1240 = vpop.f32.mrf.mxu0
    %v1241 = vadd.f32 %v822, %v1240
    %1242 = vmatmul.f32.gmra.mxu0 %v635
    %v1243 = vpop.f32.mrf.mxu0
    %v1244 = vadd.f32 %v822, %v1243
    %1245 = vmatmul.f32.gmra.mxu0 %v639
    %v1246 = vpop.f32.mrf.mxu0
    %v1247 = vadd.f32 %v822, %v1246
    %1248 = vmatmul.f32.gmra.mxu0 %v643
    %v1249 = vpop.f32.mrf.mxu0
    %v1250 = vadd.f32 %v822, %v1249
    %1251 = vmatmul.f32.gmra.mxu0 %v647
    %v1252 = vpop.f32.mrf.mxu0
    %v1253 = vadd.f32 %v822, %v1252
    %1254 = vmatmul.f32.gmra.mxu0 %v651
    %v1255 = vpop.f32.mrf.mxu0
    %v1256 = vadd.f32 %v822, %v1255
    %1257 = vmatmul.f32.gmra.mxu0 %v655
    %v1258 = vpop.f32.mrf.mxu0
    %v1259 = vadd.f32 %v822, %v1258
    %1260 = vmatmul.f32.gmra.mxu0 %v659
    %v1261 = vpop.f32.mrf.mxu0
    %v1262 = vadd.f32 %v822, %v1261
    %1263 = vmatmul.f32.gmra.mxu0 %v663
    %v1264 = vpop.f32.mrf.mxu0
    %v1265 = vadd.f32 %v822, %v1264
    %1266 = vmatmul.f32.gmra.mxu0 %v667
    %v1267 = vpop.f32.mrf.mxu0
    %v1268 = vadd.f32 %v822, %v1267
    %1269 = vmatmul.f32.gmra.mxu0 %v671
    %v1270 = vpop.f32.mrf.mxu0
    %v1271 = vadd.f32 %v822, %v1270
    %1272 = vmatmul.f32.gmra.mxu0 %v675
    %v1273 = vpop.f32.mrf.mxu0
    %v1274 = vadd.f32 %v822, %v1273
    %1275 = vmatmul.f32.gmra.mxu0 %v679
    %v1276 = vpop.f32.mrf.mxu0
    %v1277 = vadd.f32 %v822, %v1276
    %1278 = vmatmul.f32.gmra.mxu0 %v683
    %v1279 = vpop.f32.mrf.mxu0
    %v1280 = vadd.f32 %v822, %v1279
    %1281 = vmatmul.f32.gmra.mxu0 %v687
    %v1282 = vpop.f32.mrf.mxu0
    %v1283 = vadd.f32 %v822, %v1282
    %1284 = vdwg.mxu0
    %1285 = vmatpush.msra.mxu0 %v754
    %1286 = vmatpush.msra.mxu0 %v752
    %1287 = vmatpush.msra.mxu0 %v750
    %1288 = vmatpush.msra.mxu0 %v748
    %1289 = vmatpush.msra.mxu0 %v746
    %1290 = vmatpush.msra.mxu0 %v744
    %1291 = vmatpush.msra.mxu0 %v742
    %1292 = vmatpush.msra.mxu0 %v740
    %1293 = vmatpush.msra.mxu0 %v738
    %1294 = vmatpush.msra.mxu0 %v736
    %1295 = vmatpush.msra.mxu0 %v734
    %1296 = vmatpush.msra.mxu0 %v732
    %1297 = vmatpush.msra.mxu0 %v730
    %1298 = vmatpush.msra.mxu0 %v728
    %1299 = vmatpush.msra.mxu0 %v726
    %1300 = vmatpush.msra.mxu0 %v724
    %1301 = vmatmul.f32.gmra.mxu0 %v592
    %v1302 = vpop.f32.mrf.mxu0
    %v1303 = vadd.f32 %v1211, %v1302
    %1304 = vmatmul.f32.gmra.mxu0 %v596
    %v1305 = vpop.f32.mrf.mxu0
    %v1306 = vadd.f32 %v1214, %v1305
    %1307 = vmatmul.f32.gmra.mxu0 %v600
    %v1308 = vpop.f32.mrf.mxu0
    %v1309 = vadd.f32 %v1217, %v1308
    %1310 = vmatmul.f32.gmra.mxu0 %v604
    %v1311 = vpop.f32.mrf.mxu0
    %v1312 = vadd.f32 %v1220, %v1311
    %1313 = vmatmul.f32.gmra.mxu0 %v608
    %v1314 = vpop.f32.mrf.mxu0
    %v1315 = vadd.f32 %v1223, %v1314
    %1316 = vmatmul.f32.gmra.mxu0 %v612
    %v1317 = vpop.f32.mrf.mxu0
    %v1318 = vadd.f32 %v1226, %v1317
    %1319 = vmatmul.f32.gmra.mxu0 %v616
    %v1320 = vpop.f32.mrf.mxu0
    %v1321 = vadd.f32 %v1229, %v1320
    %1322 = vmatmul.f32.gmra.mxu0 %v620
    %v1323 = vpop.f32.mrf.mxu0
    %v1324 = vadd.f32 %v1232, %v1323
    %1325 = vmatmul.f32.gmra.mxu0 %v624
    %v1326 = vpop.f32.mrf.mxu0
    %v1327 = vadd.f32 %v1235, %v1326
    %1328 = vmatmul.f32.gmra.mxu0 %v628
    %v1329 = vpop.f32.mrf.mxu0
    %v1330 = vadd.f32 %v1238, %v1329
    %1331 = vmatmul.f32.gmra.mxu0 %v632
    %v1332 = vpop.f32.mrf.mxu0
    %v1333 = vadd.f32 %v1241, %v1332
    %1334 = vmatmul.f32.gmra.mxu0 %v636
    %v1335 = vpop.f32.mrf.mxu0
    %v1336 = vadd.f32 %v1244, %v1335
    %1337 = vmatmul.f32.gmra.mxu0 %v640
    %v1338 = vpop.f32.mrf.mxu0
    %v1339 = vadd.f32 %v1247, %v1338
    %1340 = vmatmul.f32.gmra.mxu0 %v644
    %v1341 = vpop.f32.mrf.mxu0
    %v1342 = vadd.f32 %v1250, %v1341
    %1343 = vmatmul.f32.gmra.mxu0 %v648
    %v1344 = vpop.f32.mrf.mxu0
    %v1345 = vadd.f32 %v1253, %v1344
    %1346 = vmatmul.f32.gmra.mxu0 %v652
    %v1347 = vpop.f32.mrf.mxu0
    %v1348 = vadd.f32 %v1256, %v1347
    %1349 = vmatmul.f32.gmra.mxu0 %v656
    %v1350 = vpop.f32.mrf.mxu0
    %v1351 = vadd.f32 %v1259, %v1350
    %1352 = vmatmul.f32.gmra.mxu0 %v660
    %v1353 = vpop.f32.mrf.mxu0
    %v1354 = vadd.f32 %v1262, %v1353
    %1355 = vmatmul.f32.gmra.mxu0 %v664
    %v1356 = vpop.f32.mrf.mxu0
    %v1357 = vadd.f32 %v1265, %v1356
    %1358 = vmatmul.f32.gmra.mxu0 %v668
    %v1359 = vpop.f32.mrf.mxu0
    %v1360 = vadd.f32 %v1268, %v1359
    %1361 = vmatmul.f32.gmra.mxu0 %v672
    %v1362 = vpop.f32.mrf.mxu0
    %v1363 = vadd.f32 %v1271, %v1362
    %1364 = vmatmul.f32.gmra.mxu0 %v676
    %v1365 = vpop.f32.mrf.mxu0
    %v1366 = vadd.f32 %v1274, %v1365
    %1367 = vmatmul.f32.gmra.mxu0 %v680
    %v1368 = vpop.f32.mrf.mxu0
    %v1369 = vadd.f32 %v1277, %v1368
    %1370 = vmatmul.f32.gmra.mxu0 %v684
    %v1371 = vpop.f32.mrf.mxu0
    %v1372 = vadd.f32 %v1280, %v1371
    %1373 = vmatmul.f32.gmra.mxu0 %v688
    %v1374 = vpop.f32.mrf.mxu0
    %v1375 = vadd.f32 %v1283, %v1374
    %1376 = vdwg.mxu0
    %1377 = vmatpush.msra.mxu0 %v786
    %1378 = vmatpush.msra.mxu0 %v784
    %1379 = vmatpush.msra.mxu0 %v782
    %1380 = vmatpush.msra.mxu0 %v780
    %1381 = vmatpush.msra.mxu0 %v778
    %1382 = vmatpush.msra.mxu0 %v776
    %1383 = vmatpush.msra.mxu0 %v774
    %1384 = vmatpush.msra.mxu0 %v772
    %1385 = vmatpush.msra.mxu0 %v770
    %1386 = vmatpush.msra.mxu0 %v768
    %1387 = vmatpush.msra.mxu0 %v766
    %1388 = vmatpush.msra.mxu0 %v764
    %1389 = vmatpush.msra.mxu0 %v762
    %1390 = vmatpush.msra.mxu0 %v760
    %1391 = vmatpush.msra.mxu0 %v758
    %1392 = vmatpush.msra.mxu0 %v756
    %1393 = vmatmul.f32.gmra.mxu0 %v593
    %v1394 = vpop.f32.mrf.mxu0
    %v1395 = vadd.f32 %v1303, %v1394
    %1396 = vmatmul.f32.gmra.mxu0 %v597
    %v1397 = vpop.f32.mrf.mxu0
    %v1398 = vadd.f32 %v1306, %v1397
    %1399 = vmatmul.f32.gmra.mxu0 %v601
    %v1400 = vpop.f32.mrf.mxu0
    %v1401 = vadd.f32 %v1309, %v1400
    %1402 = vmatmul.f32.gmra.mxu0 %v605
    %v1403 = vpop.f32.mrf.mxu0
    %v1404 = vadd.f32 %v1312, %v1403
    %1405 = vmatmul.f32.gmra.mxu0 %v609
    %v1406 = vpop.f32.mrf.mxu0
    %v1407 = vadd.f32 %v1315, %v1406
    %1408 = vmatmul.f32.gmra.mxu0 %v613
    %v1409 = vpop.f32.mrf.mxu0
    %v1410 = vadd.f32 %v1318, %v1409
    %1411 = vmatmul.f32.gmra.mxu0 %v617
    %v1412 = vpop.f32.mrf.mxu0
    %v1413 = vadd.f32 %v1321, %v1412
    %1414 = vmatmul.f32.gmra.mxu0 %v621
    %v1415 = vpop.f32.mrf.mxu0
    %v1416 = vadd.f32 %v1324, %v1415
    %1417 = vmatmul.f32.gmra.mxu0 %v625
    %v1418 = vpop.f32.mrf.mxu0
    %v1419 = vadd.f32 %v1327, %v1418
    %1420 = vmatmul.f32.gmra.mxu0 %v629
    %v1421 = vpop.f32.mrf.mxu0
    %v1422 = vadd.f32 %v1330, %v1421
    %1423 = vmatmul.f32.gmra.mxu0 %v633
    %v1424 = vpop.f32.mrf.mxu0
    %v1425 = vadd.f32 %v1333, %v1424
    %1426 = vmatmul.f32.gmra.mxu0 %v637
    %v1427 = vpop.f32.mrf.mxu0
    %v1428 = vadd.f32 %v1336, %v1427
    %1429 = vmatmul.f32.gmra.mxu0 %v641
    %v1430 = vpop.f32.mrf.mxu0
    %v1431 = vadd.f32 %v1339, %v1430
    %1432 = vmatmul.f32.gmra.mxu0 %v645
    %v1433 = vpop.f32.mrf.mxu0
    %v1434 = vadd.f32 %v1342, %v1433
    %1435 = vmatmul.f32.gmra.mxu0 %v649
    %v1436 = vpop.f32.mrf.mxu0
    %v1437 = vadd.f32 %v1345, %v1436
    %1438 = vmatmul.f32.gmra.mxu0 %v653
    %v1439 = vpop.f32.mrf.mxu0
    %v1440 = vadd.f32 %v1348, %v1439
    %1441 = vmatmul.f32.gmra.mxu0 %v657
    %v1442 = vpop.f32.mrf.mxu0
    %v1443 = vadd.f32 %v1351, %v1442
    %1444 = vmatmul.f32.gmra.mxu0 %v661
    %v1445 = vpop.f32.mrf.mxu0
    %v1446 = vadd.f32 %v1354, %v1445
    %1447 = vmatmul.f32.gmra.mxu0 %v665
    %v1448 = vpop.f32.mrf.mxu0
    %v1449 = vadd.f32 %v1357, %v1448
    %1450 = vmatmul.f32.gmra.mxu0 %v669
    %v1451 = vpop.f32.mrf.mxu0
    %v1452 = vadd.f32 %v1360, %v1451
    %1453 = vmatmul.f32.gmra.mxu0 %v673
    %v1454 = vpop.f32.mrf.mxu0
    %v1455 = vadd.f32 %v1363, %v1454
    %1456 = vmatmul.f32.gmra.mxu0 %v677
    %v1457 = vpop.f32.mrf.mxu0
    %v1458 = vadd.f32 %v1366, %v1457
    %1459 = vmatmul.f32.gmra.mxu0 %v681
    %v1460 = vpop.f32.mrf.mxu0
    %v1461 = vadd.f32 %v1369, %v1460
    %1462 = vmatmul.f32.gmra.mxu0 %v685
    %v1463 = vpop.f32.mrf.mxu0
    %v1464 = vadd.f32 %v1372, %v1463
    %1465 = vmatmul.f32.gmra.mxu0 %v689
    %v1466 = vpop.f32.mrf.mxu0
    %v1467 = vadd.f32 %v1375, %v1466
    %1468 = vdwg.mxu0
    %1469 = vmatpush.msra.mxu0 %v818
    %1470 = vmatpush.msra.mxu0 %v816
    %1471 = vmatpush.msra.mxu0 %v814
    %1472 = vmatpush.msra.mxu0 %v812
    %1473 = vmatpush.msra.mxu0 %v810
    %1474 = vmatpush.msra.mxu0 %v808
    %1475 = vmatpush.msra.mxu0 %v806
    %1476 = vmatpush.msra.mxu0 %v804
    %1477 = vmatpush.msra.mxu0 %v802
    %1478 = vmatpush.msra.mxu0 %v800
    %1479 = vmatpush.msra.mxu0 %v798
    %1480 = vmatpush.msra.mxu0 %v796
    %1481 = vmatpush.msra.mxu0 %v794
    %1482 = vmatpush.msra.mxu0 %v792
    %1483 = vmatpush.msra.mxu0 %v790
    %1484 = vmatpush.msra.mxu0 %v788
    %1485 = vmatmul.f32.gmra.mxu0 %v594
    %v1486 = vpop.f32.mrf.mxu0
    %v1487 = vadd.f32 %v1395, %v1486
    %1488 = vmatmul.f32.gmra.mxu0 %v598
    %v1489 = vpop.f32.mrf.mxu0
    %v1490 = vadd.f32 %v1398, %v1489
    %1491 = vmatmul.f32.gmra.mxu0 %v602
    %v1492 = vpop.f32.mrf.mxu0
    %v1493 = vadd.f32 %v1401, %v1492
    %1494 = vmatmul.f32.gmra.mxu0 %v606
    %v1495 = vpop.f32.mrf.mxu0
    %v1496 = vadd.f32 %v1404, %v1495
    %1497 = vmatmul.f32.gmra.mxu0 %v610
    %v1498 = vpop.f32.mrf.mxu0
    %v1499 = vadd.f32 %v1407, %v1498
    %1500 = vmatmul.f32.gmra.mxu0 %v614
    %v1501 = vpop.f32.mrf.mxu0
    %v1502 = vadd.f32 %v1410, %v1501
    %1503 = vmatmul.f32.gmra.mxu0 %v618
    %v1504 = vpop.f32.mrf.mxu0
    %v1505 = vadd.f32 %v1413, %v1504
    %1506 = vmatmul.f32.gmra.mxu0 %v622
    %v1507 = vpop.f32.mrf.mxu0
    %v1508 = vadd.f32 %v1416, %v1507
    %1509 = vmatmul.f32.gmra.mxu0 %v626
    %v1510 = vpop.f32.mrf.mxu0
    %v1511 = vadd.f32 %v1419, %v1510
    %1512 = vmatmul.f32.gmra.mxu0 %v630
    %v1513 = vpop.f32.mrf.mxu0
    %v1514 = vadd.f32 %v1422, %v1513
    %1515 = vmatmul.f32.gmra.mxu0 %v634
    %v1516 = vpop.f32.mrf.mxu0
    %v1517 = vadd.f32 %v1425, %v1516
    %1518 = vmatmul.f32.gmra.mxu0 %v638
    %v1519 = vpop.f32.mrf.mxu0
    %v1520 = vadd.f32 %v1428, %v1519
    %1521 = vmatmul.f32.gmra.mxu0 %v642
    %v1522 = vpop.f32.mrf.mxu0
    %v1523 = vadd.f32 %v1431, %v1522
    %1524 = vmatmul.f32.gmra.mxu0 %v646
    %v1525 = vpop.f32.mrf.mxu0
    %v1526 = vadd.f32 %v1434, %v1525
    %1527 = vmatmul.f32.gmra.mxu0 %v650
    %v1528 = vpop.f32.mrf.mxu0
    %v1529 = vadd.f32 %v1437, %v1528
    %1530 = vmatmul.f32.gmra.mxu0 %v654
    %v1531 = vpop.f32.mrf.mxu0
    %v1532 = vadd.f32 %v1440, %v1531
    %1533 = vmatmul.f32.gmra.mxu0 %v658
    %v1534 = vpop.f32.mrf.mxu0
    %v1535 = vadd.f32 %v1443, %v1534
    %1536 = vmatmul.f32.gmra.mxu0 %v662
    %v1537 = vpop.f32.mrf.mxu0
    %v1538 = vadd.f32 %v1446, %v1537
    %1539 = vmatmul.f32.gmra.mxu0 %v666
    %v1540 = vpop.f32.mrf.mxu0
    %v1541 = vadd.f32 %v1449, %v1540
    %1542 = vmatmul.f32.gmra.mxu0 %v670
    %v1543 = vpop.f32.mrf.mxu0
    %v1544 = vadd.f32 %v1452, %v1543
    %1545 = vmatmul.f32.gmra.mxu0 %v674
    %v1546 = vpop.f32.mrf.mxu0
    %v1547 = vadd.f32 %v1455, %v1546
    %1548 = vmatmul.f32.gmra.mxu0 %v678
    %v1549 = vpop.f32.mrf.mxu0
    %v1550 = vadd.f32 %v1458, %v1549
    %1551 = vmatmul.f32.gmra.mxu0 %v682
    %v1552 = vpop.f32.mrf.mxu0
    %v1553 = vadd.f32 %v1461, %v1552
    %1554 = vmatmul.f32.gmra.mxu0 %v686
    %v1555 = vpop.f32.mrf.mxu0
    %v1556 = vadd.f32 %v1464, %v1555
    %1557 = vmatmul.f32.gmra.mxu0 %v690
    %v1558 = vpop.f32.mrf.mxu0
    %v1559 = vadd.f32 %v1467, %v1558
    %1560 = vdwg.mxu0
    %v1561 = vmax.f32 %v1119, 0.0
    %v1562 = vmax.f32 %v1487, 0.0
    %v1563 = vmax.f32 %v1122, 0.0
    %v1564 = vmax.f32 %v1490, 0.0
    %v1565 = vmax.f32 %v1125, 0.0
    %v1566 = vmax.f32 %v1493, 0.0
    %v1567 = vmax.f32 %v1128, 0.0
    %v1568 = vmax.f32 %v1496, 0.0
    %v1569 = vmax.f32 %v1131, 0.0
    %v1570 = vmax.f32 %v1499, 0.0
    %v1571 = vmax.f32 %v1134, 0.0
    %v1572 = vmax.f32 %v1502, 0.0
    %v1573 = vmax.f32 %v1137, 0.0
    %v1574 = vmax.f32 %v1505, 0.0
    %v1575 = vmax.f32 %v1140, 0.0
    %v1576 = vmax.f32 %v1508, 0.0
    %v1577 = vmax.f32 %v1143, 0.0
    %v1578 = vmax.f32 %v1511, 0.0
    %v1579 = vmax.f32 %v1146, 0.0
    %v1580 = vmax.f32 %v1514, 0.0
    %v1581 = vmax.f32 %v1149, 0.0
    %v1582 = vmax.f32 %v1517, 0.0
    %v1583 = vmax.f32 %v1152, 0.0
    %v1584 = vmax.f32 %v1520, 0.0
    %v1585 = vmax.f32 %v1155, 0.0
    %v1586 = vmax.f32 %v1523, 0.0
    %v1587 = vmax.f32 %v1158, 0.0
    %v1588 = vmax.f32 %v1526, 0.0
    %v1589 = vmax.f32 %v1161, 0.0
    %v1590 = vmax.f32 %v1529, 0.0
    %v1591 = vmax.f32 %v1164, 0.0
    %v1592 = vmax.f32 %v1532, 0.0
    %v1593 = vmax.f32 %v1167, 0.0
    %v1594 = vmax.f32 %v1535, 0.0
    %v1595 = vmax.f32 %v1170, 0.0
    %v1596 = vmax.f32 %v1538, 0.0
    %v1597 = vmax.f32 %v1173, 0.0
    %v1598 = vmax.f32 %v1541, 0.0
    %v1599 = vmax.f32 %v1176, 0.0
    %v1600 = vmax.f32 %v1544, 0.0
    %v1601 = vmax.f32 %v1179, 0.0
    %v1602 = vmax.f32 %v1547, 0.0
    %v1603 = vmax.f32 %v1182, 0.0
    %v1604 = vmax.f32 %v1550, 0.0
    %v1605 = vmax.f32 %v1185, 0.0
    %v1606 = vmax.f32 %v1553, 0.0
    %v1607 = vmax.f32 %v1188, 0.0
    %v1608 = vmax.f32 %v1556, 0.0
    %v1609 = vmax.f32 %v1191, 0.0
    %v1610 = vmax.f32 %v1559, 0.0
    %v1611 = vld [vmem:[#allocation5] sm:$0xff]
    %v1612 = vld [vmem:[#allocation5 + $0x8] sm:$0xff]
    %v1613 = vld [vmem:[#allocation5 + $0x10] sm:$0xff]
    %v1614 = vld [vmem:[#allocation5 + $0x18] sm:$0xff]
    %v1615 = vld [vmem:[#allocation5 + $0x20] sm:$0xff]
    %v1616 = vld [vmem:[#allocation5 + $0x28] sm:$0xff]
    %v1617 = vld [vmem:[#allocation5 + $0x30] sm:$0xff]
    %v1618 = vld [vmem:[#allocation5 + $0x38] sm:$0xff]
    %v1619 = vld [vmem:[#allocation5 + $0x40] sm:$0xff]
    %v1620 = vld [vmem:[#allocation5 + $0x48] sm:$0xff]
    %v1621 = vld [vmem:[#allocation5 + $0x50] sm:$0xff]
    %v1622 = vld [vmem:[#allocation5 + $0x58] sm:$0xff]
    %v1623 = vld [vmem:[#allocation5 + $0x60] sm:$0xff]
    %v1624 = vld [vmem:[#allocation5 + $0x68] sm:$0xff]
    %v1625 = vld [vmem:[#allocation5 + $0x70] sm:$0xff]
    %v1626 = vld [vmem:[#allocation5 + $0x78] sm:$0xff]
    %v1627 = vld [vmem:[#allocation5 + $0x80] sm:$0xff]
    %v1628 = vld [vmem:[#allocation5 + $0x88] sm:$0xff]
    %v1629 = vld [vmem:[#allocation5 + $0x90] sm:$0xff]
    %v1630 = vld [vmem:[#allocation5 + $0x98] sm:$0xff]
    %v1631 = vld [vmem:[#allocation5 + $0xa0] sm:$0xff]
    %v1632 = vld [vmem:[#allocation5 + $0xa8] sm:$0xff]
    %v1633 = vld [vmem:[#allocation5 + $0xb0] sm:$0xff]
    %v1634 = vld [vmem:[#allocation5 + $0xb8] sm:$0xff]
    %v1635 = vld [vmem:[#allocation5 + $0xc0] sm:$0xff]
    %v1636 = vld [vmem:[#allocation5 + $0xc8] sm:$0xff]
    %v1637 = vld [vmem:[#allocation5 + $0xd0] sm:$0xff]
    %v1638 = vld [vmem:[#allocation5 + $0xd8] sm:$0xff]
    %v1639 = vld [vmem:[#allocation5 + $0xe0] sm:$0xff]
    %v1640 = vld [vmem:[#allocation5 + $0xe8] sm:$0xff]
    %v1641 = vld [vmem:[#allocation5 + $0xf0] sm:$0xff]
    %v1642 = vld [vmem:[#allocation5 + $0xf8] sm:$0xff]
    %v1643 = vld [vmem:[%s6] sm:$0x1]
    %v1645 = vperm.slane %v1643, 0
    %1647 = vmatpush.msra.mxu0 %v1626
    %1648 = vmatpush.msra.mxu0 %v1625
    %1649 = vmatpush.msra.mxu0 %v1624
    %1650 = vmatpush.msra.mxu0 %v1623
    %1651 = vmatpush.msra.mxu0 %v1622
    %1652 = vmatpush.msra.mxu0 %v1621
    %1653 = vmatpush.msra.mxu0 %v1620
    %1654 = vmatpush.msra.mxu0 %v1619
    %1655 = vmatpush.msra.mxu0 %v1618
    %1656 = vmatpush.msra.mxu0 %v1617
    %1657 = vmatpush.msra.mxu0 %v1616
    %1658 = vmatpush.msra.mxu0 %v1615
    %1659 = vmatpush.msra.mxu0 %v1614
    %1660 = vmatpush.msra.mxu0 %v1613
    %1661 = vmatpush.msra.mxu0 %v1612
    %1662 = vmatpush.msra.mxu0 %v1611
    %1663 = vmatmul.f32.gmra.mxu0 %v1561
    %v1664 = vpop.f32.mrf.mxu0
    %v1665 = vadd.f32 %v1645, %v1664
    %1666 = vmatmul.f32.gmra.mxu0 %v1563
    %v1667 = vpop.f32.mrf.mxu0
    %v1668 = vadd.f32 %v1645, %v1667
    %1669 = vmatmul.f32.gmra.mxu0 %v1565
    %v1670 = vpop.f32.mrf.mxu0
    %v1671 = vadd.f32 %v1645, %v1670
    %1672 = vmatmul.f32.gmra.mxu0 %v1567
    %v1673 = vpop.f32.mrf.mxu0
    %v1674 = vadd.f32 %v1645, %v1673
    %1675 = vmatmul.f32.gmra.mxu0 %v1569
    %v1676 = vpop.f32.mrf.mxu0
    %v1677 = vadd.f32 %v1645, %v1676
    %1678 = vmatmul.f32.gmra.mxu0 %v1571
    %v1679 = vpop.f32.mrf.mxu0
    %v1680 = vadd.f32 %v1645, %v1679
    %1681 = vmatmul.f32.gmra.mxu0 %v1573
    %v1682 = vpop.f32.mrf.mxu0
    %v1683 = vadd.f32 %v1645, %v1682
    %1684 = vmatmul.f32.gmra.mxu0 %v1575
    %v1685 = vpop.f32.mrf.mxu0
    %v1686 = vadd.f32 %v1645, %v1685
    %1687 = vmatmul.f32.gmra.mxu0 %v1577
    %v1688 = vpop.f32.mrf.mxu0
    %v1689 = vadd.f32 %v1645, %v1688
    %1690 = vmatmul.f32.gmra.mxu0 %v1579
    %v1691 = vpop.f32.mrf.mxu0
    %v1692 = vadd.f32 %v1645, %v1691
    %1693 = vmatmul.f32.gmra.mxu0 %v1581
    %v1694 = vpop.f32.mrf.mxu0
    %v1695 = vadd.f32 %v1645, %v1694
    %1696 = vmatmul.f32.gmra.mxu0 %v1583
    %v1697 = vpop.f32.mrf.mxu0
    %v1698 = vadd.f32 %v1645, %v1697
    %1699 = vmatmul.f32.gmra.mxu0 %v1585
    %v1700 = vpop.f32.mrf.mxu0
    %v1701 = vadd.f32 %v1645, %v1700
    %1702 = vmatmul.f32.gmra.mxu0 %v1587
    %v1703 = vpop.f32.mrf.mxu0
    %v1704 = vadd.f32 %v1645, %v1703
    %1705 = vmatmul.f32.gmra.mxu0 %v1589
    %v1706 = vpop.f32.mrf.mxu0
    %v1707 = vadd.f32 %v1645, %v1706
    %1708 = vmatmul.f32.gmra.mxu0 %v1591
    %v1709 = vpop.f32.mrf.mxu0
    %v1710 = vadd.f32 %v1645, %v1709
    %1711 = vmatmul.f32.gmra.mxu0 %v1593
    %v1712 = vpop.f32.mrf.mxu0
    %v1713 = vadd.f32 %v1645, %v1712
    %1714 = vmatmul.f32.gmra.mxu0 %v1595
    %v1715 = vpop.f32.mrf.mxu0
    %v1716 = vadd.f32 %v1645, %v1715
    %1717 = vmatmul.f32.gmra.mxu0 %v1597
    %v1718 = vpop.f32.mrf.mxu0
    %v1719 = vadd.f32 %v1645, %v1718
    %1720 = vmatmul.f32.gmra.mxu0 %v1599
    %v1721 = vpop.f32.mrf.mxu0
    %v1722 = vadd.f32 %v1645, %v1721
    %1723 = vmatmul.f32.gmra.mxu0 %v1601
    %v1724 = vpop.f32.mrf.mxu0
    %v1725 = vadd.f32 %v1645, %v1724
    %1726 = vmatmul.f32.gmra.mxu0 %v1603
    %v1727 = vpop.f32.mrf.mxu0
    %v1728 = vadd.f32 %v1645, %v1727
    %1729 = vmatmul.f32.gmra.mxu0 %v1605
    %v1730 = vpop.f32.mrf.mxu0
    %v1731 = vadd.f32 %v1645, %v1730
    %1732 = vmatmul.f32.gmra.mxu0 %v1607
    %v1733 = vpop.f32.mrf.mxu0
    %v1734 = vadd.f32 %v1645, %v1733
    %1735 = vmatmul.f32.gmra.mxu0 %v1609
    %v1736 = vpop.f32.mrf.mxu0
    %v1737 = vadd.f32 %v1645, %v1736
    %1738 = vdwg.mxu0
    %1739 = vmatpush.msra.mxu0 %v1642
    %1740 = vmatpush.msra.mxu0 %v1641
    %1741 = vmatpush.msra.mxu0 %v1640
    %1742 = vmatpush.msra.mxu0 %v1639
    %1743 = vmatpush.msra.mxu0 %v1638
    %1744 = vmatpush.msra.mxu0 %v1637
    %1745 = vmatpush.msra.mxu0 %v1636
    %1746 = vmatpush.msra.mxu0 %v1635
    %1747 = vmatpush.msra.mxu0 %v1634
    %1748 = vmatpush.msra.mxu0 %v1633
    %1749 = vmatpush.msra.mxu0 %v1632
    %1750 = vmatpush.msra.mxu0 %v1631
    %1751 = vmatpush.msra.mxu0 %v1630
    %1752 = vmatpush.msra.mxu0 %v1629
    %1753 = vmatpush.msra.mxu0 %v1628
    %1754 = vmatpush.msra.mxu0 %v1627
    %1755 = vmatmul.f32.gmra.mxu0 %v1562
    %v1756 = vpop.f32.mrf.mxu0
    %v1757 = vadd.f32 %v1665, %v1756
    %1758 = vmatmul.f32.gmra.mxu0 %v1564
    %v1759 = vpop.f32.mrf.mxu0
    %v1760 = vadd.f32 %v1668, %v1759
    %1761 = vmatmul.f32.gmra.mxu0 %v1566
    %v1762 = vpop.f32.mrf.mxu0
    %v1763 = vadd.f32 %v1671, %v1762
    %1764 = vmatmul.f32.gmra.mxu0 %v1568
    %v1765 = vpop.f32.mrf.mxu0
    %v1766 = vadd.f32 %v1674, %v1765
    %1767 = vmatmul.f32.gmra.mxu0 %v1570
    %v1768 = vpop.f32.mrf.mxu0
    %v1769 = vadd.f32 %v1677, %v1768
    %1770 = vmatmul.f32.gmra.mxu0 %v1572
    %v1771 = vpop.f32.mrf.mxu0
    %v1772 = vadd.f32 %v1680, %v1771
    %1773 = vmatmul.f32.gmra.mxu0 %v1574
    %v1774 = vpop.f32.mrf.mxu0
    %v1775 = vadd.f32 %v1683, %v1774
    %1776 = vmatmul.f32.gmra.mxu0 %v1576
    %v1777 = vpop.f32.mrf.mxu0
    %v1778 = vadd.f32 %v1686, %v1777
    %1779 = vmatmul.f32.gmra.mxu0 %v1578
    %v1780 = vpop.f32.mrf.mxu0
    %v1781 = vadd.f32 %v1689, %v1780
    %1782 = vmatmul.f32.gmra.mxu0 %v1580
    %v1783 = vpop.f32.mrf.mxu0
    %v1784 = vadd.f32 %v1692, %v1783
    %1785 = vmatmul.f32.gmra.mxu0 %v1582
    %v1786 = vpop.f32.mrf.mxu0
    %v1787 = vadd.f32 %v1695, %v1786
    %1788 = vmatmul.f32.gmra.mxu0 %v1584
    %v1789 = vpop.f32.mrf.mxu0
    %v1790 = vadd.f32 %v1698, %v1789
    %1791 = vmatmul.f32.gmra.mxu0 %v1586
    %v1792 = vpop.f32.mrf.mxu0
    %v1793 = vadd.f32 %v1701, %v1792
    %1794 = vmatmul.f32.gmra.mxu0 %v1588
    %v1795 = vpop.f32.mrf.mxu0
    %v1796 = vadd.f32 %v1704, %v1795
    %1797 = vmatmul.f32.gmra.mxu0 %v1590
    %v1798 = vpop.f32.mrf.mxu0
    %v1799 = vadd.f32 %v1707, %v1798
    %1800 = vmatmul.f32.gmra.mxu0 %v1592
    %v1801 = vpop.f32.mrf.mxu0
    %v1802 = vadd.f32 %v1710, %v1801
    %1803 = vmatmul.f32.gmra.mxu0 %v1594
    %v1804 = vpop.f32.mrf.mxu0
    %v1805 = vadd.f32 %v1713, %v1804
    %1806 = vmatmul.f32.gmra.mxu0 %v1596
    %v1807 = vpop.f32.mrf.mxu0
    %v1808 = vadd.f32 %v1716, %v1807
    %1809 = vmatmul.f32.gmra.mxu0 %v1598
    %v1810 = vpop.f32.mrf.mxu0
    %v1811 = vadd.f32 %v1719, %v1810
    %1812 = vmatmul.f32.gmra.mxu0 %v1600
    %v1813 = vpop.f32.mrf.mxu0
    %v1814 = vadd.f32 %v1722, %v1813
    %1815 = vmatmul.f32.gmra.mxu0 %v1602
    %v1816 = vpop.f32.mrf.mxu0
    %v1817 = vadd.f32 %v1725, %v1816
    %1818 = vmatmul.f32.gmra.mxu0 %v1604
    %v1819 = vpop.f32.mrf.mxu0
    %v1820 = vadd.f32 %v1728, %v1819
    %1821 = vmatmul.f32.gmra.mxu0 %v1606
    %v1822 = vpop.f32.mrf.mxu0
    %v1823 = vadd.f32 %v1731, %v1822
    %1824 = vmatmul.f32.gmra.mxu0 %v1608
    %v1825 = vpop.f32.mrf.mxu0
    %v1826 = vadd.f32 %v1734, %v1825
    %1827 = vmatmul.f32.gmra.mxu0 %v1610
    %v1828 = vpop.f32.mrf.mxu0
    %v1829 = vadd.f32 %v1737, %v1828
    %1830 = vdwg.mxu0
    %v1831 = vmax.f32 %v1757, 0.0
    %v1832 = vmax.f32 %v1760, 0.0
    %v1833 = vmax.f32 %v1763, 0.0
    %v1834 = vmax.f32 %v1766, 0.0
    %v1835 = vmax.f32 %v1769, 0.0
    %v1836 = vmax.f32 %v1772, 0.0
    %v1837 = vmax.f32 %v1775, 0.0
    %v1838 = vmax.f32 %v1778, 0.0
    %v1839 = vmax.f32 %v1781, 0.0
    %v1840 = vmax.f32 %v1784, 0.0
    %v1841 = vmax.f32 %v1787, 0.0
    %v1842 = vmax.f32 %v1790, 0.0
    %v1843 = vmax.f32 %v1793, 0.0
    %v1844 = vmax.f32 %v1796, 0.0
    %v1845 = vmax.f32 %v1799, 0.0
    %v1846 = vmax.f32 %v1802, 0.0
    %v1847 = vmax.f32 %v1805, 0.0
    %v1848 = vmax.f32 %v1808, 0.0
    %v1849 = vmax.f32 %v1811, 0.0
    %v1850 = vmax.f32 %v1814, 0.0
    %v1851 = vmax.f32 %v1817, 0.0
    %v1852 = vmax.f32 %v1820, 0.0
    %v1853 = vmax.f32 %v1823, 0.0
    %v1854 = vmax.f32 %v1826, 0.0
    %v1855 = vmax.f32 %v1829, 0.0
    %v1856 = vld [vmem:[#allocation7] sm:$0xff]
    %v1857 = vld [vmem:[#allocation7 + $0x8] sm:$0xff]
    %v1858 = vld [vmem:[#allocation7 + $0x10] sm:$0xff]
    %v1859 = vld [vmem:[#allocation7 + $0x18] sm:$0xff]
    %v1860 = vld [vmem:[#allocation7 + $0x20] sm:$0xff]
    %v1861 = vld [vmem:[#allocation7 + $0x28] sm:$0xff]
    %v1862 = vld [vmem:[#allocation7 + $0x30] sm:$0xff]
    %v1863 = vld [vmem:[#allocation7 + $0x38] sm:$0xff]
    %v1864 = vld [vmem:[#allocation7 + $0x40] sm:$0xff]
    %v1865 = vld [vmem:[#allocation7 + $0x48] sm:$0xff]
    %v1866 = vld [vmem:[#allocation7 + $0x50] sm:$0xff]
    %v1867 = vld [vmem:[#allocation7 + $0x58] sm:$0xff]
    %v1868 = vld [vmem:[#allocation7 + $0x60] sm:$0xff]
    %v1869 = vld [vmem:[#allocation7 + $0x68] sm:$0xff]
    %v1870 = vld [vmem:[#allocation7 + $0x70] sm:$0xff]
    %v1871 = vld [vmem:[#allocation7 + $0x78] sm:$0xff]
    %v1872 = vld [vmem:[%s8] sm:$0x1]
    %v1874 = vperm.slane %v1872, 0
    %1876 = vmatpush.msra.mxu0 %v1871
    %1877 = vmatpush.msra.mxu0 %v1870
    %1878 = vmatpush.msra.mxu0 %v1869
    %1879 = vmatpush.msra.mxu0 %v1868
    %1880 = vmatpush.msra.mxu0 %v1867
    %1881 = vmatpush.msra.mxu0 %v1866
    %1882 = vmatpush.msra.mxu0 %v1865
    %1883 = vmatpush.msra.mxu0 %v1864
    %1884 = vmatpush.msra.mxu0 %v1863
    %1885 = vmatpush.msra.mxu0 %v1862
    %1886 = vmatpush.msra.mxu0 %v1861
    %1887 = vmatpush.msra.mxu0 %v1860
    %1888 = vmatpush.msra.mxu0 %v1859
    %1889 = vmatpush.msra.mxu0 %v1858
    %1890 = vmatpush.msra.mxu0 %v1857
    %1891 = vmatpush.msra.mxu0 %v1856
    %1892 = vmatmul.f32.gmra.mxu0 %v1831
    %v1893 = vpop.f32.mrf.mxu0
    %v1894 = vadd.f32 %v1874, %v1893
    %1895 = vmatmul.f32.gmra.mxu0 %v1832
    %v1896 = vpop.f32.mrf.mxu0
    %v1897 = vadd.f32 %v1874, %v1896
    %1898 = vmatmul.f32.gmra.mxu0 %v1833
    %v1899 = vpop.f32.mrf.mxu0
    %v1900 = vadd.f32 %v1874, %v1899
    %1901 = vmatmul.f32.gmra.mxu0 %v1834
    %v1902 = vpop.f32.mrf.mxu0
    %v1903 = vadd.f32 %v1874, %v1902
    %1904 = vmatmul.f32.gmra.mxu0 %v1835
    %v1905 = vpop.f32.mrf.mxu0
    %v1906 = vadd.f32 %v1874, %v1905
    %1907 = vmatmul.f32.gmra.mxu0 %v1836
    %v1908 = vpop.f32.mrf.mxu0
    %v1909 = vadd.f32 %v1874, %v1908
    %1910 = vmatmul.f32.gmra.mxu0 %v1837
    %v1911 = vpop.f32.mrf.mxu0
    %v1912 = vadd.f32 %v1874, %v1911
    %1913 = vmatmul.f32.gmra.mxu0 %v1838
    %v1914 = vpop.f32.mrf.mxu0
    %v1915 = vadd.f32 %v1874, %v1914
    %1916 = vmatmul.f32.gmra.mxu0 %v1839
    %v1917 = vpop.f32.mrf.mxu0
    %v1918 = vadd.f32 %v1874, %v1917
    %1919 = vmatmul.f32.gmra.mxu0 %v1840
    %v1920 = vpop.f32.mrf.mxu0
    %v1921 = vadd.f32 %v1874, %v1920
    %1922 = vmatmul.f32.gmra.mxu0 %v1841
    %v1923 = vpop.f32.mrf.mxu0
    %v1924 = vadd.f32 %v1874, %v1923
    %1925 = vmatmul.f32.gmra.mxu0 %v1842
    %v1926 = vpop.f32.mrf.mxu0
    %v1927 = vadd.f32 %v1874, %v1926
    %1928 = vmatmul.f32.gmra.mxu0 %v1843
    %v1929 = vpop.f32.mrf.mxu0
    %v1930 = vadd.f32 %v1874, %v1929
    %1931 = vmatmul.f32.gmra.mxu0 %v1844
    %v1932 = vpop.f32.mrf.mxu0
    %v1933 = vadd.f32 %v1874, %v1932
    %1934 = vmatmul.f32.gmra.mxu0 %v1845
    %v1935 = vpop.f32.mrf.mxu0
    %v1936 = vadd.f32 %v1874, %v1935
    %1937 = vmatmul.f32.gmra.mxu0 %v1846
    %v1938 = vpop.f32.mrf.mxu0
    %v1939 = vadd.f32 %v1874, %v1938
    %1940 = vmatmul.f32.gmra.mxu0 %v1847
    %v1941 = vpop.f32.mrf.mxu0
    %v1942 = vadd.f32 %v1874, %v1941
    %1943 = vmatmul.f32.gmra.mxu0 %v1848
    %v1944 = vpop.f32.mrf.mxu0
    %v1945 = vadd.f32 %v1874, %v1944
    %1946 = vmatmul.f32.gmra.mxu0 %v1849
    %v1947 = vpop.f32.mrf.mxu0
    %v1948 = vadd.f32 %v1874, %v1947
    %1949 = vmatmul.f32.gmra.mxu0 %v1850
    %v1950 = vpop.f32.mrf.mxu0
    %v1951 = vadd.f32 %v1874, %v1950
    %1952 = vmatmul.f32.gmra.mxu0 %v1851
    %v1953 = vpop.f32.mrf.mxu0
    %v1954 = vadd.f32 %v1874, %v1953
    %1955 = vmatmul.f32.gmra.mxu0 %v1852
    %v1956 = vpop.f32.mrf.mxu0
    %v1957 = vadd.f32 %v1874, %v1956
    %1958 = vmatmul.f32.gmra.mxu0 %v1853
    %v1959 = vpop.f32.mrf.mxu0
    %v1960 = vadd.f32 %v1874, %v1959
    %1961 = vmatmul.f32.gmra.mxu0 %v1854
    %v1962 = vpop.f32.mrf.mxu0
    %v1963 = vadd.f32 %v1874, %v1962
    %1964 = vmatmul.f32.gmra.mxu0 %v1855
    %v1965 = vpop.f32.mrf.mxu0
    %v1966 = vadd.f32 %v1874, %v1965
    %1967 = vdwg.mxu0
    %1968 = vst [vmem:[#allocation8] sm:$0xff] %v1894
    %1969 = vst [vmem:[#allocation8 + $0x8] sm:$0xff] %v1897
    %1970 = vst [vmem:[#allocation8 + $0x10] sm:$0xff] %v1900
    %1971 = vst [vmem:[#allocation8 + $0x18] sm:$0xff] %v1903
    %1972 = vst [vmem:[#allocation8 + $0x20] sm:$0xff] %v1906
    %1973 = vst [vmem:[#allocation8 + $0x28] sm:$0xff] %v1909
    %1974 = vst [vmem:[#allocation8 + $0x30] sm:$0xff] %v1912
    %1975 = vst [vmem:[#allocation8 + $0x38] sm:$0xff] %v1915
    %1976 = vst [vmem:[#allocation8 + $0x40] sm:$0xff] %v1918
    %1977 = vst [vmem:[#allocation8 + $0x48] sm:$0xff] %v1921
    %1978 = vst [vmem:[#allocation8 + $0x50] sm:$0xff] %v1924
    %1979 = vst [vmem:[#allocation8 + $0x58] sm:$0xff] %v1927
    %1980 = vst [vmem:[#allocation8 + $0x60] sm:$0xff] %v1930
    %1981 = vst [vmem:[#allocation8 + $0x68] sm:$0xff] %v1933
    %1982 = vst [vmem:[#allocation8 + $0x70] sm:$0xff] %v1936
    %1983 = vst [vmem:[#allocation8 + $0x78] sm:$0xff] %v1939
    %1984 = vst [vmem:[#allocation8 + $0x80] sm:$0xff] %v1942
    %1985 = vst [vmem:[#allocation8 + $0x88] sm:$0xff] %v1945
    %1986 = vst [vmem:[#allocation8 + $0x90] sm:$0xff] %v1948
    %1987 = vst [vmem:[#allocation8 + $0x98] sm:$0xff] %v1951
    %1988 = vst [vmem:[#allocation8 + $0xa0] sm:$0xff] %v1954
    %1989 = vst [vmem:[#allocation8 + $0xa8] sm:$0xff] %v1957
    %1990 = vst [vmem:[#allocation8 + $0xb0] sm:$0xff] %v1960
    %1991 = vst [vmem:[#allocation8 + $0xb8] sm:$0xff] %v1963
    %1992 = vst [vmem:[#allocation8 + $0xc0] sm:$0xff] %v1966
    // Predicated region
    $region50: #{tpu_custom_call.1} parent=1 // pred_check
      _
    $region51: #{tpu_custom_call.1} parent=1 // pred_check_branch
      %1994 = sbr.rel (0) target = $region53
    $region52: #{tpu_custom_call.1} parent=1 // pred_region
      %1996 = vsyncadd [#allocation4], 0
      %s1997 = sshll.u32 [#allocation8], 4
      %s1998 = int_to_ptr.vmem [resolvable:$true] %s1997
      %s1999 = sshll.u32 %s9, 4
      %s2000 = int_to_ptr.hbm [resolvable:$true] %s1999
      %2005 = dma.vmem_to_hbm [thread:$0]  %s1998, 3200, %s2000, [#allocation4], 128, 128, 8
    $region53: #{tpu_custom_call.1} parent=1 // pred_fallthru
      _
    // Predicated region
    $region54: #{tpu_custom_call.1} parent=1 // pred_check
      _
    $region55: #{tpu_custom_call.1} parent=1 // pred_check_branch
      %2007 = sbr.rel (0) target = $region57
    $region56: #{tpu_custom_call.1} parent=1 // pred_region
      %2009 = dma.done [#allocation4], 3200
    $region57: #{tpu_custom_call.1} parent=1 // pred_fallthru
      _
    %2010 = vsyncpa [#allocation3], 1
    %2011 = vsyncpa [#allocation6], 1
    %2012 = vsyncpa [#allocation4], 1

</llo_original>
